<compile_context>
chip_gen: v7x
topology: tpu7x:2x2x1
jax: 0.10.0
libtpu: 0.0.40
codegen_flags: <defaults>
</compile_context>

<pallas_src>
import math
import functools

import jax
import jax.numpy as jnp
from jax import lax
from jax.experimental import pallas as pl
from jax.experimental.pallas import tpu as pltpu


def _gelu_tanh(x):
    # Matches FeedForward.gelu (tanh approximation), computed in f32.
    return 0.5 * x * (1.0 + jnp.tanh(math.sqrt(2.0 / math.pi) * (x + 0.044715 * x * x * x)))


def _tpu_vmem_bytes():
    try:
        return int(pltpu.get_tpu_info().vmem_capacity_bytes)
    except Exception:
        return 128 << 20


def _vmem_limit_bytes():
    try:
        return int(pltpu.get_tpu_info().vmem_capacity_bytes) * 3 // 4
    except Exception:
        return None


def _seq_tile(s):
    # v7x only has 64 MiB VMEM -> cap seq tiles at 256 there, 512 on v5e/v6e.
    cap = 256 if _tpu_vmem_bytes() < (100 << 20) else 512
    for t in (512, 256, 128):
        if t <= cap and s % t == 0:
            return t
    # TODO(synk): pad S up to a multiple of 128 (masking the tail) instead of
    # falling back to one full-S block for large, non-128-aligned S.
    return s


def _hidden_tile(h4):
    # FFN hidden (4F) chunk: multiple of 128 (lane constraint) or full.
    for t in (512, 256, 128):
        if h4 % t == 0:
            return t
    return h4


# --------------------- kernel 1: fused QKV projection ---------------------
def qkv_proj_kernel(x_ref, w_ref, b_ref, q_ref, k_ref, v_ref, *, n_heads):
    ts, feat = x_ref.shape[1], x_ref.shape[2]
    h = n_heads
    d = feat // h
    scale = 1.0 / math.sqrt(d)

    x = x_ref[0].astype(jnp.bfloat16)                     # (ts, F) bf16 MXU input
    qkv = jnp.dot(x, w_ref[...], preferred_element_type=jnp.float32) + b_ref[...]
    q = qkv[:, :feat] * scale                             # fold 1/sqrt(D) once
    k = qkv[:, feat:2 * feat]
    v = qkv[:, 2 * feat:]

    # Pre-split heads; K stored transposed (H, D, ts) -> lane-dense minor dim.
    q_ref[0] = q.reshape(ts, h, d).transpose(1, 0, 2).astype(jnp.bfloat16)   # (H, ts, D)
    k_ref[0] = k.reshape(ts, h, d).transpose(1, 2, 0).astype(jnp.bfloat16)   # (H, D, ts)
    v_ref[0] = v.reshape(ts, h, d).transpose(1, 0, 2).astype(jnp.bfloat16)   # (H, ts, D)


# --------------------- kernel 2: flash attention ---------------------
def flash_attn_kernel(q_ref, k_ref, v_ref, padk_ref, allpad_ref, o_ref,
                      m_sc, l_sc, acc_sc):
    _, H, TQ, D = q_ref.shape
    TK = k_ref.shape[3]                                   # k is (1, H, D, TK)
    qi = pl.program_id(1)
    ki = pl.program_id(2)

    @pl.when(ki == 0)
    def _():
        m_sc[...] = jnp.full(m_sc.shape, -jnp.inf, m_sc.dtype)
        l_sc[...] = jnp.zeros(l_sc.shape, l_sc.dtype)
        acc_sc[...] = jnp.zeros(acc_sc.shape, acc_sc.dtype)

    q_start = qi * TQ
    k_start = ki * TK

    # Skip KV tiles that are entirely in the future (causal); their DMA is also
    # skipped because the k/v index maps clamp the block index.
    @pl.when(k_start <= q_start + TQ - 1)
    def _():
        qh = q_ref[0]                                     # (H, TQ, D) bf16, pre-scaled
        kh = k_ref[0]                                     # (H, D, TK) bf16
        vh = v_ref[0]                                     # (H, TK, D) bf16

        s = jnp.einsum('hqd,hdk->hqk', qh, kh,
                       preferred_element_type=jnp.float32)   # (H, TQ, TK) f32

        pad_k = padk_ref[0] > 0.5                         # (1, TK), True == padded key

        def _causal_and_pad(sv):
            rows = q_start + lax.broadcasted_iota(jnp.int32, (TQ, TK), 0)
            cols = k_start + lax.broadcasted_iota(jnp.int32, (TQ, TK), 1)
            msk = (cols > rows)[None, :, :] | pad_k[:, None, :]
            return jnp.where(msk, -1e30, sv)              # finite -> no inf-inf NaNs

        def _pad_only(sv):
            return jnp.where(pad_k[:, None, :], -1e30, sv)

        # Only diagonal tiles need the causal iota work; interior tiles just
        # mask padded keys.
        s = lax.cond(k_start + TK - 1 > q_start, _causal_and_pad, _pad_only, s)

        m_prev = m_sc[...]                                # (H, TQ)
        m_new = jnp.maximum(m_prev, jnp.max(s, axis=-1))
        alpha = jnp.exp(m_prev - m_new)
        p = jnp.exp(s - m_new[:, :, None])                # f32
        l_sc[...] = alpha * l_sc[...] + jnp.sum(p, axis=-1)
        acc_sc[...] = alpha[:, :, None] * acc_sc[...] + jnp.einsum(
            'hqk,hkd->hqd', p.astype(jnp.bfloat16), vh,
            preferred_element_type=jnp.float32)
        m_sc[...] = m_new

    # Finalize on the last KV step: normalize, merge heads, write bf16.
    @pl.when(ki == pl.num_programs(2) - 1)
    def _():
        inv_l = pl.reciprocal(l_sc[...], approx=True)     # EUP, frees VALU slots
        heads = acc_sc[...] * inv_l[:, :, None]           # (H, TQ, D) f32
        heads = jnp.where(allpad_ref[0] > 0.5, 0.0, heads)   # all keys padded -> 0
        o_ref[0] = heads.transpose(1, 0, 2).reshape(TQ, H * D).astype(o_ref.dtype)


# ---- kernel 3: out_proj + LN1 + FeedForward(gelu) + LN2 (hidden-dim tiled) ----
def epilogue_kernel(attn_ref, x_ref, w_out_ref, b_out_ref, ln1_g_ref, ln1_b_ref,
                    w_ff1_ref, b_ff1_ref, w_ff2_ref, b_ff2_ref,
                    ln2_g_ref, ln2_b_ref, o_ref, y_sc, f_sc):
    hi = pl.program_id(2)

    @pl.when(hi == 0)
    def _():
        a = jnp.dot(attn_ref[0], w_out_ref[...],
                    preferred_element_type=jnp.float32) + b_out_ref[...]
        y = x_ref[0] + a                                  # residual (n_attn == 1)
        mu = jnp.mean(y, axis=-1, keepdims=True)
        var = jnp.mean((y - mu) ** 2, axis=-1, keepdims=True)
        y_sc[...] = (y - mu) * lax.rsqrt(var + 1e-5) * ln1_g_ref[...] + ln1_b_ref[...]
        f_sc[...] = jnp.zeros(f_sc.shape, f_sc.dtype)

    # One chunk of the FFN hidden dimension per grid step.
    h1 = jnp.dot(y_sc[...].astype(jnp.bfloat16), w_ff1_ref[...],
                 preferred_element_type=jnp.float32) + b_ff1_ref[...]
    h1 = _gelu_tanh(h1)                                   # f32 (v5e-safe)
    f_sc[...] += jnp.dot(h1.astype(jnp.bfloat16), w_ff2_ref[...],
                         preferred_element_type=jnp.float32)

    @pl.when(hi == pl.num_programs(2) - 1)
    def _():
        z = y_sc[...] + f_sc[...] + b_ff2_ref[...]        # residual + ff bias
        mu2 = jnp.mean(z, axis=-1, keepdims=True)
        var2 = jnp.mean((z - mu2) ** 2, axis=-1, keepdims=True)
        o_ref[0] = ((z - mu2) * lax.rsqrt(var2 + 1e-5) * ln2_g_ref[...]
                    + ln2_b_ref[...]).astype(o_ref.dtype)


def transformer_block(x, padding_mask, params, n_heads):
    """x: (B, S, F) f32, padding_mask: (B, S) bool. Returns (x_out, padding_mask)."""
    B, S, F = x.shape
    H = n_heads
    D = F // H
    FH = 4 * F

    (w_qkv, b_qkv, w_out, b_out,
     ln1_g, ln1_b, w_ff1, b_ff1, w_ff2, b_ff2, ln2_g, ln2_b) = params

    # Cast matmul weights to bf16 once (MXU-native, halves resident weight VMEM).
    w_qkv_b = w_qkv.astype(jnp.bfloat16)
    w_out_b = w_out.astype(jnp.bfloat16)
    w_ff1_b = w_ff1.astype(jnp.bfloat16)
    w_ff2_b = w_ff2.astype(jnp.bfloat16)

    pad_f = padding_mask.astype(jnp.float32).reshape(B, 1, S)
    all_pad = jnp.all(padding_mask, axis=-1).astype(jnp.float32).reshape(B, 1, 1)

    ts = _seq_tile(S)
    tq = tk = ts
    hc = _hidden_tile(FH)
    n_s, n_q, n_kv, n_h = S // ts, S // tq, S // tk, FH // hc
    vmem_limit = _vmem_limit_bytes()

    # Constant-index weight/bias blocks: single-buffered (DMA'd once anyway).
    def const1(shape, idx):
        return pl.BlockSpec(shape, idx, pipeline_mode=pl.Buffered(1))

    # --------------- call 1: fused QKV projection ---------------
    q_hbm, k_hbm, v_hbm = pl.pallas_call(
        functools.partial(qkv_proj_kernel, n_heads=H),
        out_shape=(jax.ShapeDtypeStruct((B, H, S, D), jnp.bfloat16),
                   jax.ShapeDtypeStruct((B, H, D, S), jnp.bfloat16),
                   jax.ShapeDtypeStruct((B, H, S, D), jnp.bfloat16)),
        grid=(B, n_s),
        in_specs=[pl.BlockSpec((1, ts, F), lambda b, s: (b, s, 0)),
                  const1((F, 3 * F), lambda b, s: (0, 0)),
                  const1((1, 3 * F), lambda b, s: (0, 0))],
        out_specs=(pl.BlockSpec((1, H, ts, D), lambda b, s: (b, 0, s, 0)),
                   pl.BlockSpec((1, H, D, ts), lambda b, s: (b, 0, 0, s)),
                   pl.BlockSpec((1, H, ts, D), lambda b, s: (b, 0, s, 0))),
        compiler_params=pltpu.CompilerParams(
            dimension_semantics=("parallel", "parallel"),
            vmem_limit_bytes=vmem_limit),
        cost_estimate=pl.CostEstimate(
            flops=2 * B * S * F * 3 * F,
            transcendentals=0,
            bytes_accessed=B * S * F * 4 + F * 3 * F * 2 + 3 * F * 4 + 3 * B * S * F * 2),
    )(x, w_qkv_b, b_qkv)

    # --------------- call 2: flash attention ---------------
    def _last_kv(qi, ki):
        # Last KV tile this q block actually needs (causal); clamping makes the
        # block index repeat so Pallas skips the DMA of dead tiles.
        return jnp.minimum(ki, ((qi + 1) * tq - 1) // tk)

    attn_out = pl.pallas_call(
        flash_attn_kernel,
        out_shape=jax.ShapeDtypeStruct((B, S, F), jnp.bfloat16),
        grid=(B, n_q, n_kv),
        in_specs=[
            pl.BlockSpec((1, H, tq, D), lambda b, qi, ki: (b, 0, qi, 0)),        # q
            pl.BlockSpec((1, H, D, tk), lambda b, qi, ki: (b, 0, 0, _last_kv(qi, ki))),  # kT
            pl.BlockSpec((1, H, tk, D), lambda b, qi, ki: (b, 0, _last_kv(qi, ki), 0)),  # v
            pl.BlockSpec((1, 1, tk), lambda b, qi, ki: (b, 0, _last_kv(qi, ki))),        # key pad
            pl.BlockSpec((1, 1, 1), lambda b, qi, ki: (b, 0, 0)),                # all-pad flag
        ],
        out_specs=pl.BlockSpec((1, tq, F), lambda b, qi, ki: (b, qi, 0)),
        scratch_shapes=[
            pltpu.VMEM((H, tq), jnp.float32),       # running max (2-D: no lane padding)
            pltpu.VMEM((H, tq), jnp.float32),       # running denom
            pltpu.VMEM((H, tq, D), jnp.float32),    # output accumulator
        ],
        compiler_params=pltpu.CompilerParams(
            dimension_semantics=("parallel", "parallel", "arbitrary"),
            vmem_limit_bytes=vmem_limit),
        cost_estimate=pl.CostEstimate(
            flops=4 * B * H * S * S * D,
            transcendentals=B * H * S * S,
            bytes_accessed=3 * B * S * F * 2 + B * S * F * 2 + B * S * 4),
    )(q_hbm, k_hbm, v_hbm, pad_f, all_pad)

    # --------------- call 3: out_proj + LN1 + FFN + LN2 ---------------
    x_out = pl.pallas_call(
        epilogue_kernel,
        out_shape=jax.ShapeDtypeStruct((B, S, F), jnp.float32),
        grid=(B, n_s, n_h),
        in_specs=[
            pl.BlockSpec((1, ts, F), lambda b, si, hi: (b, si, 0)),   # attention output
            pl.BlockSpec((1, ts, F), lambda b, si, hi: (b, si, 0)),   # x (residual)
            const1((F, F), lambda b, si, hi: (0, 0)),                 # out_proj W
            const1((1, F), lambda b, si, hi: (0, 0)),                 # out_proj b
            const1((1, F), lambda b, si, hi: (0, 0)),                 # attn_norm gamma
            const1((1, F), lambda b, si, hi: (0, 0)),                 # attn_norm beta
            pl.BlockSpec((F, hc), lambda b, si, hi: (0, hi)),         # ff layer_1 W chunk
            pl.BlockSpec((1, hc), lambda b, si, hi: (0, hi)),         # ff layer_1 b chunk
            pl.BlockSpec((hc, F), lambda b, si, hi: (hi, 0)),         # ff layer_2 W chunk
            const1((1, F), lambda b, si, hi: (0, 0)),                 # ff layer_2 b
            const1((1, F), lambda b, si, hi: (0, 0)),                 # ff_norm gamma
            const1((1, F), lambda b, si, hi: (0, 0)),                 # ff_norm beta
        ],
        out_specs=pl.BlockSpec((1, ts, F), lambda b, si, hi: (b, si, 0)),
        scratch_shapes=[
            pltpu.VMEM((ts, F), jnp.float32),   # y after LN1
            pltpu.VMEM((ts, F), jnp.float32),   # FFN accumulator
        ],
        compiler_params=pltpu.CompilerParams(
            dimension_semantics=("parallel", "parallel", "arbitrary"),
            vmem_limit_bytes=vmem_limit),
        cost_estimate=pl.CostEstimate(
            flops=2 * B * S * 9 * F * F,
            transcendentals=B * S * 4 * F,
            bytes_accessed=B * S * F * 2 + B * S * F * 4 + 9 * F * F * 2 + B * S * F * 4),
    )(attn_out, x, w_out_b, b_out, ln1_g, ln1_b,
      w_ff1_b, b_ff1, w_ff2_b, b_ff2, ln2_g, ln2_b)

    return x_out, padding_mask


def init_params(key, n_features):
    F = n_features
    ks = jax.random.split(key, 8)
    # weights stored as (in, out) == W_pytorch.T, std=0.02 like _init_weights
    w_qkv = 0.02 * jax.random.normal(ks[0], (F, 3 * F), jnp.float32)
    b_qkv = 0.02 * jax.random.normal(ks[1], (1, 3 * F), jnp.float32)
    w_out = 0.02 * jax.random.normal(ks[2], (F, F), jnp.float32)
    b_out = 0.02 * jax.random.normal(ks[3], (1, F), jnp.float32)
    w_ff1 = 0.02 * jax.random.normal(ks[4], (F, 4 * F), jnp.float32)
    b_ff1 = 0.02 * jax.random.normal(ks[5], (1, 4 * F), jnp.float32)
    w_ff2 = 0.02 * jax.random.normal(ks[6], (4 * F, F), jnp.float32)
    b_ff2 = 0.02 * jax.random.normal(ks[7], (1, F), jnp.float32)
    ln1_g = jnp.ones((1, F), jnp.float32)
    ln1_b = jnp.zeros((1, F), jnp.float32)
    ln2_g = jnp.ones((1, F), jnp.float32)
    ln2_b = jnp.zeros((1, F), jnp.float32)
    return (w_qkv, b_qkv, w_out, b_out, ln1_g, ln1_b,
            w_ff1, b_ff1, w_ff2, b_ff2, ln2_g, ln2_b)


def reference_block(x, padding_mask, params, n_heads):
    """Pure-JAX f32 reference matching the PyTorch forward (eval mode)."""
    (w_qkv, b_qkv, w_out, b_out,
     ln1_g, ln1_b, w_ff1, b_ff1, w_ff2, b_ff2, ln2_g, ln2_b) = params
    B, S, F = x.shape
    H = n_heads
    D = F // H
    qkv = jnp.einsum('bsf,fo->bso', x, w_qkv, precision=lax.Precision.HIGHEST) + b_qkv[0]
    q, k, v = qkv[..., :F], qkv[..., F:2 * F], qkv[..., 2 * F:]
    q = q.reshape(B, S, H, D).transpose(0, 2, 1, 3)
    k = k.reshape(B, S, H, D).transpose(0, 2, 1, 3)
    v = v.reshape(B, S, H, D).transpose(0, 2, 1, 3)
    s = jnp.einsum('bhqd,bhkd->bhqk', q, k, precision=lax.Precision.HIGHEST) / math.sqrt(D)
    future = jnp.triu(jnp.ones((S, S), bool), 1)
    s = jnp.where(future[None, None], -jnp.inf, s)
    s = jnp.where(padding_mask[:, None, None, :], -jnp.inf, s)
    w = jax.nn.softmax(s, axis=-1)
    w = jnp.where(jnp.all(padding_mask, axis=-1)[:, None, None, None], 0.0, w)
    a = jnp.einsum('bhqk,bhkd->bhqd', w, v, precision=lax.Precision.HIGHEST)
    a = a.transpose(0, 2, 1, 3).reshape(B, S, F)
    a = jnp.einsum('bsf,fo->bso', a, w_out, precision=lax.Precision.HIGHEST) + b_out[0]
    y = x + a
    mu = y.mean(-1, keepdims=True)
    var = ((y - mu) ** 2).mean(-1, keepdims=True)
    y = (y - mu) / jnp.sqrt(var + 1e-5) * ln1_g[0] + ln1_b[0]
    h1 = _gelu_tanh(jnp.einsum('bsf,fo->bso', y, w_ff1, precision=lax.Precision.HIGHEST) + b_ff1[0])
    f = jnp.einsum('bsf,fo->bso', h1, w_ff2, precision=lax.Precision.HIGHEST) + b_ff2[0]
    z = y + f
    mu2 = z.mean(-1, keepdims=True)
    var2 = ((z - mu2) ** 2).mean(-1, keepdims=True)
    return (z - mu2) / jnp.sqrt(var2 + 1e-5) * ln2_g[0] + ln2_b[0]


if __name__ == "__main__":
    B, S, F, H = 2, 8, 32, 4   # batch, seq, n_features, n_heads
    key = jax.random.PRNGKey(0)
    kx, kp = jax.random.split(key)
    x = jax.random.normal(kx, (B, S, F), jnp.float32)
    # typical right-padding: batch 0 fully valid, batch 1 has last 3 positions padded
    valid_lens = jnp.array([S, 5], jnp.int32)
    padding_mask = jnp.arange(S)[None, :] >= valid_lens[:, None]   # (B, S) bool, True == pad
    params = init_params(kp, F)

    x_out, pad_out = transformer_block(x, padding_mask, params, n_heads=H)
    x_out = jax.block_until_ready(x_out)

    ref = reference_block(x, padding_mask, params, n_heads=H)
    assert jnp.allclose(x_out, ref, atol=2e-2, rtol=2e-2), "kernel mismatch vs reference"

    print("KERNEL_OK")
</pallas_src>

<mosaic_0001>
module attributes {stable_mosaic.version = 11 : i64} {
  func.func @qkv_proj_kernel(%arg0: i32, %arg1: i32, %arg2: memref<1x8x32xf32, #tpu.memory_space<vmem>>, %arg3: memref<32x96xbf16, #tpu.memory_space<vmem>>, %arg4: memref<1x96xf32, #tpu.memory_space<vmem>>, %arg5: memref<1x4x8x8xbf16, #tpu.memory_space<vmem>>, %arg6: memref<1x4x8x8xbf16, #tpu.memory_space<vmem>>, %arg7: memref<1x4x8x8xbf16, #tpu.memory_space<vmem>>) attributes {dimension_semantics = [#tpu.dimension_semantics<parallel>, #tpu.dimension_semantics<parallel>], iteration_bounds = array<i64: 2, 1>, scalar_prefetch = 0 : i64, scratch_operands = 0 : i64, tpu.core_type = #tpu.core_type<tc>, window_params = [{transform_indices = @transform_0, window_bounds = array<i64: 1, 8, 32>}, {pipeline_mode = #tpu.pipeline_mode<synchronous>, transform_indices = @transform_1, window_bounds = array<i64: 32, 96>}, {pipeline_mode = #tpu.pipeline_mode<synchronous>, transform_indices = @transform_2, window_bounds = array<i64: 1, 96>}, {transform_indices = @transform_3, window_bounds = array<i64: 1, 4, 8, 8>}, {transform_indices = @transform_4, window_bounds = array<i64: 1, 4, 8, 8>}, {transform_indices = @transform_5, window_bounds = array<i64: 1, 4, 8, 8>}]} {
    %c0 = arith.constant 0 : index
    %c0_0 = arith.constant 0 : index
    %c0_1 = arith.constant 0 : index
    %0 = vector.load %arg2[%c0, %c0_0, %c0_1] : memref<1x8x32xf32, #tpu.memory_space<vmem>>, vector<1x8x32xf32>
    %1 = vector.shape_cast %0 : vector<1x8x32xf32> to vector<8x32xf32>
    %2 = arith.truncf %1 : vector<8x32xf32> to vector<8x32xbf16>
    %c0_2 = arith.constant 0 : index
    %c0_3 = arith.constant 0 : index
    %3 = vector.load %arg3[%c0_2, %c0_3] : memref<32x96xbf16, #tpu.memory_space<vmem>>, vector<32x96xbf16>
    %cst = arith.constant dense<0.000000e+00> : vector<8x96xf32>
    %4 = tpu.matmul %2, %3, %cst {dimension_numbers = #tpu.dot_dimension_numbers<[1], [0], [0], [1], [0, 0, 1, 1], [], []>} : vector<8x32xbf16>, vector<32x96xbf16>, vector<8x96xf32> -> vector<8x96xf32>
    %c0_4 = arith.constant 0 : index
    %c0_5 = arith.constant 0 : index
    %5 = vector.load %arg4[%c0_4, %c0_5] : memref<1x96xf32, #tpu.memory_space<vmem>>, vector<1x96xf32>
    %6 = vector.broadcast %5 : vector<1x96xf32> to vector<8x96xf32>
    %7 = arith.addf %4, %6 : vector<8x96xf32>
    %8 = vector.extract_strided_slice %7 {offsets = [0, 0], sizes = [8, 32], strides = [1, 1]} : vector<8x96xf32> to vector<8x32xf32>
    %cst_6 = arith.constant 0.353553385 : f32
    %9 = vector.broadcast %cst_6 : f32 to vector<8x32xf32>
    %10 = arith.mulf %8, %9 : vector<8x32xf32>
    %11 = vector.extract_strided_slice %7 {offsets = [0, 32], sizes = [8, 32], strides = [1, 1]} : vector<8x96xf32> to vector<8x32xf32>
    %12 = vector.extract_strided_slice %7 {offsets = [0, 64], sizes = [8, 32], strides = [1, 1]} : vector<8x96xf32> to vector<8x32xf32>
    %13 = vector.shape_cast %10 : vector<8x32xf32> to vector<8x4x8xf32>
    %14 = tpu.transpose %13, [1, 0, 2] : vector<8x4x8xf32> -> vector<4x8x8xf32>
    %15 = arith.truncf %14 : vector<4x8x8xf32> to vector<4x8x8xbf16>
    %c0_7 = arith.constant 0 : index
    %c0_8 = arith.constant 0 : index
    %c0_9 = arith.constant 0 : index
    %c0_10 = arith.constant 0 : index
    %16 = vector.load %arg5[%c0_7, %c0_8, %c0_9, %c0_10] : memref<1x4x8x8xbf16, #tpu.memory_space<vmem>>, vector<1x4x8x8xbf16>
    %17 = vector.shape_cast %16 : vector<1x4x8x8xbf16> to vector<4x8x8xbf16>
    %18 = vector.shape_cast %15 : vector<4x8x8xbf16> to vector<1x4x8x8xbf16>
    tpu.vector_store %arg5[%c0_7, %c0_8, %c0_9, %c0_10], %18 {strides = array<i32>} : memref<1x4x8x8xbf16, #tpu.memory_space<vmem>>, vector<1x4x8x8xbf16>,
    %19 = vector.shape_cast %11 : vector<8x32xf32> to vector<8x4x8xf32>
    %20 = tpu.transpose %19, [1, 2, 0] : vector<8x4x8xf32> -> vector<4x8x8xf32>
    %21 = arith.truncf %20 : vector<4x8x8xf32> to vector<4x8x8xbf16>
    %c0_11 = arith.constant 0 : index
    %c0_12 = arith.constant 0 : index
    %c0_13 = arith.constant 0 : index
    %c0_14 = arith.constant 0 : index
    %22 = vector.load %arg6[%c0_11, %c0_12, %c0_13, %c0_14] : memref<1x4x8x8xbf16, #tpu.memory_space<vmem>>, vector<1x4x8x8xbf16>
    %23 = vector.shape_cast %22 : vector<1x4x8x8xbf16> to vector<4x8x8xbf16>
    %24 = vector.shape_cast %21 : vector<4x8x8xbf16> to vector<1x4x8x8xbf16>
    tpu.vector_store %arg6[%c0_11, %c0_12, %c0_13, %c0_14], %24 {strides = array<i32>} : memref<1x4x8x8xbf16, #tpu.memory_space<vmem>>, vector<1x4x8x8xbf16>,
    %25 = vector.shape_cast %12 : vector<8x32xf32> to vector<8x4x8xf32>
    %26 = tpu.transpose %25, [1, 0, 2] : vector<8x4x8xf32> -> vector<4x8x8xf32>
    %27 = arith.truncf %26 : vector<4x8x8xf32> to vector<4x8x8xbf16>
    %c0_15 = arith.constant 0 : index
    %c0_16 = arith.constant 0 : index
    %c0_17 = arith.constant 0 : index
    %c0_18 = arith.constant 0 : index
    %28 = vector.load %arg7[%c0_15, %c0_16, %c0_17, %c0_18] : memref<1x4x8x8xbf16, #tpu.memory_space<vmem>>, vector<1x4x8x8xbf16>
    %29 = vector.shape_cast %28 : vector<1x4x8x8xbf16> to vector<4x8x8xbf16>
    %30 = vector.shape_cast %27 : vector<4x8x8xbf16> to vector<1x4x8x8xbf16>
    tpu.vector_store %arg7[%c0_15, %c0_16, %c0_17, %c0_18], %30 {strides = array<i32>} : memref<1x4x8x8xbf16, #tpu.memory_space<vmem>>, vector<1x4x8x8xbf16>,
    return
  }
  func.func @transform_0(%arg0: i32, %arg1: i32) -> (i32, i32, i32) {
    %c0_i32 = arith.constant 0 : i32
    %c0_i32_0 = arith.constant 0 : i32
    return %arg0, %arg1, %c0_i32 : i32, i32, i32
  }
  func.func @transform_1(%arg0: i32, %arg1: i32) -> (i32, i32) {
    %c0_i32 = arith.constant 0 : i32
    %c0_i32_0 = arith.constant 0 : i32
    %c0_i32_1 = arith.constant 0 : i32
    return %c0_i32, %c0_i32_0 : i32, i32
  }
  func.func @transform_2(%arg0: i32, %arg1: i32) -> (i32, i32) {
    %c0_i32 = arith.constant 0 : i32
    %c0_i32_0 = arith.constant 0 : i32
    %c0_i32_1 = arith.constant 0 : i32
    return %c0_i32, %c0_i32_0 : i32, i32
  }
  func.func @transform_3(%arg0: i32, %arg1: i32) -> (i32, i32, i32, i32) {
    %c0_i32 = arith.constant 0 : i32
    %c0_i32_0 = arith.constant 0 : i32
    %c0_i32_1 = arith.constant 0 : i32
    return %arg0, %c0_i32, %arg1, %c0_i32_0 : i32, i32, i32, i32
  }
  func.func @transform_4(%arg0: i32, %arg1: i32) -> (i32, i32, i32, i32) {
    %c0_i32 = arith.constant 0 : i32
    %c0_i32_0 = arith.constant 0 : i32
    %c0_i32_1 = arith.constant 0 : i32
    return %arg0, %c0_i32, %c0_i32_0, %arg1 : i32, i32, i32, i32
  }
  func.func @transform_5(%arg0: i32, %arg1: i32) -> (i32, i32, i32, i32) {
    %c0_i32 = arith.constant 0 : i32
    %c0_i32_0 = arith.constant 0 : i32
    %c0_i32_1 = arith.constant 0 : i32
    return %arg0, %c0_i32, %arg1, %c0_i32_0 : i32, i32, i32, i32
  }
}

</mosaic_0001>

<llo_original>
// kernel: tpu_custom_call.1
$region0: #{tpu_custom_call.1}
  #allocation0 [shape = 'u32[]', space=smem, size = 0x4, offset = 0x4, fixed_abs, tag = 'smem constant byte address 0x4 - core index']
  #allocation1 [shape = 'u32[144,128]{1,0:T(1,128)}', space=vmem, size = 0x12000, scoped, tag = 'internal scratch']
  %s0 = inlined_call_operand.hbm [shape: f32[2,8,32], index: 0, kind: input, shape index: {}]
  %s1 = inlined_call_operand.hbm [shape: bf16[32,96], index: 1, kind: input, shape index: {}]
  %s2 = inlined_call_operand.vmem [shape: f32[1,96], index: 2, kind: input, shape index: {}]
  %s3 = inlined_call_operand.hbm [shape: bf16[2,4,8,8], index: 3, kind: output, shape index: {0}]
  %s4 = inlined_call_operand.hbm [shape: bf16[2,4,8,8], index: 4, kind: output, shape index: {1}]
  %s5 = inlined_call_operand.hbm [shape: bf16[2,4,8,8], index: 5, kind: output, shape index: {2}]
  %6 = xla_tuple %s3, %s4, %s5
  %s7 = sld [smem:[#allocation0]]
  $region69: #{tpu_custom_call.1} parent=0
    _
  %s9 = ssub.s32 1, %s7
  %s10 = scalar_select 0, %s9, %s7
  $region1: #{tpu_custom_call.1} parent=0
    #allocation2 [shape = 'u8[8192]{0}', space=vmem, size = 0x2000, scoped, tag = 'input window, operand 0']
    #allocation3 [shape = 's32[2]{0}', space=sflag, size = 0x8, scoped, tag = 'scoped memory for tpu_custom_call.1']
    #allocation4 [shape = 's32[2]{0}', space=sflag, size = 0x8, scoped, tag = 'scoped memory for tpu_custom_call.1']
    #allocation5 [shape = 'u8[8192]{0}', space=vmem, size = 0x2000, scoped, tag = 'input window, operand 1, single buffered']
    #allocation6 [shape = 's32[1]{0}', space=sflag, size = 0x4, scoped, tag = 'scoped memory for tpu_custom_call.1']
    #allocation7 [shape = 'u8[16384]{0}', space=vmem, size = 0x4000, scoped, tag = 'output window, operand 0']
    #allocation8 [shape = 'u8[16384]{0}', space=vmem, size = 0x4000, scoped, tag = 'output window, operand 1']
    #allocation9 [shape = 's32[2]{0}', space=sflag, size = 0x8, scoped, tag = 'scoped memory for tpu_custom_call.1']
    #allocation10 [shape = 'u8[16384]{0}', space=vmem, size = 0x4000, scoped, tag = 'output window, operand 2']
    %11 = vsyncpa [#allocation3], 0
    %s12 = scalar_lea.sflag [#allocation3], 1
    %13 = vsyncpa %s12, 0
    %14 = vsyncpa [#allocation6], 0
    %15 = vsyncpa [#allocation4], 0
    %s16 = scalar_lea.sflag [#allocation4], 1
    %17 = vsyncpa %s16, 0
    %18 = vsyncpa [#allocation9], 0
    %s19 = scalar_lea.sflag [#allocation9], 1
    %20 = vsyncpa %s19, 0
    loop: start=0, step=1, limit=4
    $region2: #{tpu_custom_call.1} parent=1 // loop_pre_header
      _
    $region3: #{tpu_custom_call.1} parent=1 // loop_header
      %s22 = sphi 0, %s26
      %p23 = scmp.ge.s32.totalorder %s22, 4
      %s29 = sphi 0, %s41
      %s30 = sphi 0, %s37
      %s31 = sphi 0, %s29
      %s32 = sphi 0, %s30
      %s33 = sphi 0, %s31
      %s34 = sphi 0, %s32
      %s46 = sphi 0, %s48
      %s49 = sphi 0, %s46
      %s50 = sphi 0, %s49
      %s66 = sphi 0, %s50
      %s70 = sphi 0, %s70
      %s72 = sphi 0, %s70
      %s73 = sphi 0, %s72
      %s87 = sphi 0, %s73
      %s91 = sphi 0, %s91
      %s93 = sphi 0, %s91
      %s94 = sphi 0, %s93
      %s108 = sphi 0, %s94
      %s116 = sphi 0, %s118
      %s119 = sphi 0, %s116
      %s120 = sphi 0, %s119
      %s136 = sphi 0, %s120
      %s144 = sphi 0, %s146
      %s147 = sphi 0, %s144
      %s148 = sphi 0, %s147
      %s164 = sphi 0, %s148
      %s172 = sphi 0, %s174
      %s175 = sphi 0, %s172
      %s176 = sphi 0, %s175
      %s192 = sphi 0, %s176
    $region4: #{tpu_custom_call.1} parent=1 // loop_header_branch
      %25 = sbr.rel (%p23) target = $region8
    $region5: #{tpu_custom_call.1} parent=1 // loop_body
      %s27 = ssub.s32 %s22, 1
      %s28 = ssub.s32 %s22, 2
      %s35 = sadd.s32 1, %s30
      %p36 = scmp.ge.s32.totalorder %s35, 1
      %s37 = scalar_select %p36, 0, %s35
      %s38 = sadd.s32 1, %s29
      %s39 = scalar_select %p36, %s38, %s29
      %p40 = scmp.ge.s32.totalorder %s39, 2
      %s41 = scalar_select %p40, 0, %s39
      %s42 = ssub.s32 %s29, %s41
      %s43 = ssub.s32 %s30, %s37
      %s44 = sor.u32 %s42, %s43
      %p45 = scmp.eq.s32.totalorder %s44, 0
      %s47 = sadd.s32 %s46, 1
      %s48 = scalar_select %p45, %s46, %s47
      %p51 = pneg %p45
      %p52 = scmp.eq.s32.totalorder %s22, 1
      %p53 = por %p51, %p52
      %p54 = scmp.ne.s32.totalorder %s46, %s49
      %p55 = scmp.eq.s32.totalorder %s22, 0
      %p56 = por %p54, %p55
      %p57 = scmp.ne.s32.totalorder %s46, %s49
      %p58 = scmp.eq.s32.totalorder %s27, 1
      %p59 = por %p57, %p58
      %p60 = scmp.ne.s32.totalorder %s49, %s50
      %p61 = scmp.eq.s32.totalorder %s27, 0
      %p62 = por %p60, %p61
      %p63 = scmp.ne.s32.totalorder %s49, %s50
      %p64 = scmp.eq.s32.totalorder %s28, 1
      %p65 = por %p63, %p64
      %p67 = scmp.ne.s32.totalorder %s50, %s66
      %p68 = scmp.eq.s32.totalorder %s28, 0
      %p69 = por %p67, %p68
      %s71 = sadd.s32 %s70, 1
      %p74 = scmp.eq.s32.totalorder %s22, 1
      %p75 = scmp.ne.s32.totalorder %s70, %s72
      %p76 = scmp.eq.s32.totalorder %s22, 0
      %p77 = por %p75, %p76
      %p78 = scmp.ne.s32.totalorder %s70, %s72
      %p79 = scmp.eq.s32.totalorder %s27, 1
      %p80 = por %p78, %p79
      %p81 = scmp.ne.s32.totalorder %s72, %s73
      %p82 = scmp.eq.s32.totalorder %s27, 0
      %p83 = por %p81, %p82
      %p84 = scmp.ne.s32.totalorder %s72, %s73
      %p85 = scmp.eq.s32.totalorder %s28, 1
      %p86 = por %p84, %p85
      %p88 = scmp.ne.s32.totalorder %s73, %s87
      %p89 = scmp.eq.s32.totalorder %s28, 0
      %p90 = por %p88, %p89
      %s92 = sadd.s32 %s91, 1
      %p95 = scmp.eq.s32.totalorder %s22, 1
      %p96 = scmp.ne.s32.totalorder %s91, %s93
      %p97 = scmp.eq.s32.totalorder %s22, 0
      %p98 = por %p96, %p97
      %p99 = scmp.ne.s32.totalorder %s91, %s93
      %p100 = scmp.eq.s32.totalorder %s27, 1
      %p101 = por %p99, %p100
      %p102 = scmp.ne.s32.totalorder %s93, %s94
      %p103 = scmp.eq.s32.totalorder %s27, 0
      %p104 = por %p102, %p103
      %p105 = scmp.ne.s32.totalorder %s93, %s94
      %p106 = scmp.eq.s32.totalorder %s28, 1
      %p107 = por %p105, %p106
      %p109 = scmp.ne.s32.totalorder %s94, %s108
      %p110 = scmp.eq.s32.totalorder %s28, 0
      %p111 = por %p109, %p110
      %s112 = ssub.s32 %s29, %s41
      %s113 = ssub.s32 %s30, %s37
      %s114 = sor.u32 %s112, %s113
      %p115 = scmp.eq.s32.totalorder %s114, 0
      %s117 = sadd.s32 %s116, 1
      %s118 = scalar_select %p115, %s116, %s117
      %p121 = pneg %p115
      %p122 = scmp.eq.s32.totalorder %s22, 1
      %p123 = por %p121, %p122
      %p124 = scmp.ne.s32.totalorder %s116, %s119
      %p125 = scmp.eq.s32.totalorder %s22, 0
      %p126 = por %p124, %p125
      %p127 = scmp.ne.s32.totalorder %s116, %s119
      %p128 = scmp.eq.s32.totalorder %s27, 1
      %p129 = por %p127, %p128
      %p130 = scmp.ne.s32.totalorder %s119, %s120
      %p131 = scmp.eq.s32.totalorder %s27, 0
      %p132 = por %p130, %p131
      %p133 = scmp.ne.s32.totalorder %s119, %s120
      %p134 = scmp.eq.s32.totalorder %s28, 1
      %p135 = por %p133, %p134
      %p137 = scmp.ne.s32.totalorder %s120, %s136
      %p138 = scmp.eq.s32.totalorder %s28, 0
      %p139 = por %p137, %p138
      %s140 = ssub.s32 %s29, %s41
      %s141 = ssub.s32 %s30, %s37
      %s142 = sor.u32 %s140, %s141
      %p143 = scmp.eq.s32.totalorder %s142, 0
      %s145 = sadd.s32 %s144, 1
      %s146 = scalar_select %p143, %s144, %s145
      %p149 = pneg %p143
      %p150 = scmp.eq.s32.totalorder %s22, 1
      %p151 = por %p149, %p150
      %p152 = scmp.ne.s32.totalorder %s144, %s147
      %p153 = scmp.eq.s32.totalorder %s22, 0
      %p154 = por %p152, %p153
      %p155 = scmp.ne.s32.totalorder %s144, %s147
      %p156 = scmp.eq.s32.totalorder %s27, 1
      %p157 = por %p155, %p156
      %p158 = scmp.ne.s32.totalorder %s147, %s148
      %p159 = scmp.eq.s32.totalorder %s27, 0
      %p160 = por %p158, %p159
      %p161 = scmp.ne.s32.totalorder %s147, %s148
      %p162 = scmp.eq.s32.totalorder %s28, 1
      %p163 = por %p161, %p162
      %p165 = scmp.ne.s32.totalorder %s148, %s164
      %p166 = scmp.eq.s32.totalorder %s28, 0
      %p167 = por %p165, %p166
      %s168 = ssub.s32 %s29, %s41
      %s169 = ssub.s32 %s30, %s37
      %s170 = sor.u32 %s168, %s169
      %p171 = scmp.eq.s32.totalorder %s170, 0
      %s173 = sadd.s32 %s172, 1
      %s174 = scalar_select %p171, %s172, %s173
      %p177 = pneg %p171
      %p178 = scmp.eq.s32.totalorder %s22, 1
      %p179 = por %p177, %p178
      %p180 = scmp.ne.s32.totalorder %s172, %s175
      %p181 = scmp.eq.s32.totalorder %s22, 0
      %p182 = por %p180, %p181
      %p183 = scmp.ne.s32.totalorder %s172, %s175
      %p184 = scmp.eq.s32.totalorder %s27, 1
      %p185 = por %p183, %p184
      %p186 = scmp.ne.s32.totalorder %s175, %s176
      %p187 = scmp.eq.s32.totalorder %s27, 0
      %p188 = por %p186, %p187
      %p189 = scmp.ne.s32.totalorder %s175, %s176
      %p190 = scmp.eq.s32.totalorder %s28, 1
      %p191 = por %p189, %p190
      %p193 = scmp.ne.s32.totalorder %s176, %s192
      %p194 = scmp.eq.s32.totalorder %s28, 0
      %p195 = por %p193, %p194
      %p196 = scmp.le.s32.totalorder 1, %s22
      %p197 = scmp.lt.s32.totalorder %s22, 3
      %p198 = pnand %p196, %p197
      %p199 = pneg %p198
      // Predicated region
      $region9: #{tpu_custom_call.1} parent=5 // pred_check
        _
      $region10: #{tpu_custom_call.1} parent=5 // pred_check_branch
        %201 = sbr.rel (%p198) target = $region12
      $region11: #{tpu_custom_call.1} parent=5 // pred_region
        %s202 = ssub.s32 %s22, 1
        // Predicated region
        $region13: #{tpu_custom_call.1} parent=11 // pred_check
          %p203 = pneg %p83
        $region14: #{tpu_custom_call.1} parent=11 // pred_check_branch
          %205 = sbr.rel (%p203) target = $region16
        $region15: #{tpu_custom_call.1} parent=11 // pred_region
          %s207 = ssub.s32 256, 256
          %208 = vsyncadd [#allocation6], %s207
          %s209 = sshll.u32 [#allocation5], 4
          %s210 = int_to_ptr.vmem [resolvable:$true] %s209
          %215 = dma.hbm_to_vmem [thread:$0]  %s1, 256, %s210, [#allocation6], 64, 64, 4
        $region16: #{tpu_custom_call.1} parent=11 // pred_fallthru
          _
        // Predicated region
        $region17: #{tpu_custom_call.1} parent=11 // pred_check
          %p216 = pneg %p104
        $region18: #{tpu_custom_call.1} parent=11 // pred_check_branch
          %218 = sbr.rel (%p216) target = $region20
        $region19: #{tpu_custom_call.1} parent=11 // pred_region
          _
        $region20: #{tpu_custom_call.1} parent=11 // pred_fallthru
          _
      $region12: #{tpu_custom_call.1} parent=5 // pred_fallthru
        _
      %p219 = scmp.lt.s32.totalorder %s22, 2
      // Predicated region
      $region21: #{tpu_custom_call.1} parent=5 // pred_check
        %p220 = pneg %p219
      $region22: #{tpu_custom_call.1} parent=5 // pred_check_branch
        %222 = sbr.rel (%p220) target = $region24
      $region23: #{tpu_custom_call.1} parent=5 // pred_region
        // Predicated region
        $region25: #{tpu_custom_call.1} parent=23 // pred_check
          %p223 = pneg %p56
        $region26: #{tpu_custom_call.1} parent=23 // pred_check_branch
          %225 = sbr.rel (%p223) target = $region28
        $region27: #{tpu_custom_call.1} parent=23 // pred_region
          %s226 = sand.u32 %s46, 1
          %s227 = scalar_lea.sflag [#allocation3], %s226
          %s228 = sand.u32 %s46, 1
          %s229 = smul.addr %s228, 8
          %s230 = scalar_lea.vmem [#allocation2], %s229
          %s232 = ssub.s32 128, 128
          %233 = vsyncadd %s227, %s232
          %s234 = sadd.s32 %s30, %s29
          %s235 = smul.addr %s234, 128
          %s236 = scalar_lea.hbm %s0, %s235
          %s238 = sshll.u32 %s230, 4
          %s239 = int_to_ptr.vmem [resolvable:$true] %s238
          %241 = dma.hbm_to_vmem [thread:$0]  %s236, 128, %s239, %s227
        $region28: #{tpu_custom_call.1} parent=23 // pred_fallthru
          _
      $region24: #{tpu_custom_call.1} parent=5 // pred_fallthru
        _
      %p242 = scmp.le.s32.totalorder 1, %s22
      %p243 = scmp.lt.s32.totalorder %s22, 3
      %p244 = pnand %p242, %p243
      %p245 = pneg %p244
      // Predicated region
      $region29: #{tpu_custom_call.1} parent=5 // pred_check
        _
      $region30: #{tpu_custom_call.1} parent=5 // pred_check_branch
        %247 = sbr.rel (%p244) target = $region32
      $region31: #{tpu_custom_call.1} parent=5 // pred_region
        %s248 = ssub.s32 %s22, 1
        %s249 = sand.u32 %s49, 1
        %s250 = scalar_lea.sflag [#allocation3], %s249
        %s251 = sand.u32 %s49, 1
        %s252 = smul.addr %s251, 8
        %s253 = scalar_lea.vmem [#allocation2], %s252
        // Predicated region
        $region33: #{tpu_custom_call.1} parent=31 // pred_check
          %p254 = pneg %p62
        $region34: #{tpu_custom_call.1} parent=31 // pred_check_branch
          %256 = sbr.rel (%p254) target = $region36
        $region35: #{tpu_custom_call.1} parent=31 // pred_region
          %257 = dma.done %s250, 128
        $region36: #{tpu_custom_call.1} parent=31 // pred_fallthru
          _
        // Predicated region
        $region37: #{tpu_custom_call.1} parent=31 // pred_check
          %p258 = pneg %p83
        $region38: #{tpu_custom_call.1} parent=31 // pred_check_branch
          %260 = sbr.rel (%p258) target = $region40
        $region39: #{tpu_custom_call.1} parent=31 // pred_region
          %261 = dma.done [#allocation6], 256
        $region40: #{tpu_custom_call.1} parent=31 // pred_fallthru
          _
        %s262 = sand.u32 %s49, 1
        %s263 = scalar_lea.sflag [#allocation3], %s262
        %s264 = sand.u32 %s49, 1
        %s265 = smul.addr %s264, 8
        %s266 = scalar_lea.vmem [#allocation2], %s265
        %p267 = pneg %p62
        %p268 = pneg %p59
        %p269 = pneg %p83
        %p270 = pneg %p80
        %p271 = pneg %p104
        %p272 = pneg %p101
        %p273 = pneg %p132
        %p274 = pneg %p129
        %s275 = sand.u32 %s119, 1
        %s276 = scalar_lea.sflag [#allocation4], %s275
        %s277 = sand.u32 %s119, 1
        %s278 = smul.addr %s277, 16
        %s279 = scalar_lea.vmem [#allocation7], %s278
        %p280 = pneg %p160
        %p281 = pneg %p157
        %s282 = sand.u32 %s27, 1
        %s283 = scalar_lea.sflag [#allocation9], %s282
        %s284 = sand.u32 %s147, 1
        %s285 = smul.addr %s284, 16
        %s286 = scalar_lea.vmem [#allocation8], %s285
        %p287 = pneg %p188
        %p288 = pneg %p185
        %s289 = sand.u32 %s27, 1
        %s290 = scalar_lea.sflag [#allocation9], %s289
        %s291 = sand.u32 %s175, 1
        %s292 = smul.addr %s291, 16
        %s293 = scalar_lea.vmem [#allocation10], %s292
        %v295 = vld [vmem:[%s253] sm:$0xff]
        %v296 = vpack.c.bf16 %v295, %v295
        %v297 = vld [vmem:[#allocation5] sm:$0xf]
        %v298 = vld [vmem:[#allocation5 + $0x4] sm:$0xf]
        %v299 = vld [vmem:[#allocation5 + $0x8] sm:$0xf]
        %v300 = vld [vmem:[#allocation5 + $0xc] sm:$0xf]
        %v301 = vld [vmem:[%s2] sm:$0x1]
        %v303 = vlaneseq
        %v304 = vshrl.u32 %v303, 7
        %v305 = vsub.s32 0, %v304
        %v306 = vrot.slane %v301, %v305
        %v312 = vunpack.c.l.b16 %v297
        %v313 = vunpack.c.l.b16 %v298
        %v314 = vunpack.c.l.b16 %v299
        %v315 = vunpack.c.l.b16 %v300
        %v316 = vpack.c.b16 %v313, %v312
        %v317 = vpack.c.b16 %v315, %v314
        %vm320 = vcmask 261120
        %v322 = vsel %vm320, %v296, 0
        %324 = vmatprep.subr.bf16.mxu0 0
        %325 = vmatpush1.bf16.msra.mxu0 %v316
        %326 = vmatprep.subr.bf16.mxu0 0
        %327 = vmatpush1.bf16.msra.mxu0 %v317
        %328 = vmatprep.subr.bf16.mxu0 0
        %329 = vmatpush1.bf16.msra.mxu0 0
        %330 = vmatprep.subr.bf16.mxu0 0
        %331 = vmatpush1.bf16.msra.mxu0 0
        %332 = vmatprep.subr.bf16.mxu0 0
        %333 = vmatpush1.bf16.msra.mxu0 0
        %334 = vmatprep.subr.bf16.mxu0 0
        %335 = vmatpush1.bf16.msra.mxu0 0
        %336 = vmatprep.subr.bf16.mxu0 0
        %337 = vmatpush1.bf16.msra.mxu0 0
        %338 = vmatprep.subr.bf16.mxu0 0
        %339 = vmatpush1.bf16.msra.mxu0 0
        %340 = vmatprep.subr.bf16.mxu0 0
        %341 = vmatpush1.bf16.msra.mxu0 0
        %342 = vmatprep.subr.bf16.mxu0 0
        %343 = vmatpush1.bf16.msra.mxu0 0
        %344 = vmatprep.subr.bf16.mxu0 0
        %345 = vmatpush1.bf16.msra.mxu0 0
        %346 = vmatprep.subr.bf16.mxu0 0
        %347 = vmatpush1.bf16.msra.mxu0 0
        %348 = vmatprep.subr.bf16.mxu0 0
        %349 = vmatpush1.bf16.msra.mxu0 0
        %350 = vmatprep.subr.bf16.mxu0 0
        %351 = vmatpush1.bf16.msra.mxu0 0
        %352 = vmatprep.subr.bf16.mxu0 0
        %353 = vmatpush1.bf16.msra.mxu0 0
        %354 = vmatprep.subr.bf16.mxu0 0
        %355 = vmatpush1.bf16.msra.mxu0 0
        %356 = vmatprep.mubr.bf16.mxu0 0
        %357 = vmatmul.mubr.bf16.gmra.mrb[0].mxu0 %v322
        %v358 = vpop.f32.mrb[0].mxu0
        %v359 = vadd.f32 %v306, %v358
        %v360 = vpop.f32.mrb[0].mxu0
        %v361 = vpop.f32.mrb[0].mxu0
        %v362 = vpop.f32.mrb[0].mxu0
        %363 = vdwg.mxu0
        %v364 = vmul.f32 %v359, 0.35355338
        %366 = vrot.lane.b32.xlu0 %v364, 120
        %v367 = vpop.permute.xlu0 %366
        %369 = vrot.lane.b32.xlu0 %v364, 112
        %v370 = vpop.permute.xlu0 %369
        %372 = vrot.lane.b32.xlu0 %v364, 104
        %v373 = vpop.permute.xlu0 %372
        %v375 = vcombine.low %v364, %v370
        %v376 = vcombine.high %v364, %v370
        %v378 = vunpack.c.l.s4 1983009808
        %v379 = vunpack.c.0.s8 %v378
        %v380 = vlaneseq
        %v381 = vshrl.u32 %v380, 7
        %v382 = vsub.s32 %v379, %v381
        %v383 = vrot.slane %v375, %v382
        %v385 = vunpack.c.l.s4 1983009808
        %v386 = vunpack.c.0.s8 %v385
        %v387 = vlaneseq
        %v388 = vshrl.u32 %v387, 7
        %v389 = vsub.s32 %v386, %v388
        %v390 = vrot.slane %v376, %v389
        %v391 = vcombine.low %v367, %v373
        %v392 = vcombine.high %v367, %v373
        %v394 = vunpack.c.l.s4 1983009808
        %v395 = vunpack.c.0.s8 %v394
        %v396 = vlaneseq
        %v397 = vshrl.u32 %v396, 7
        %v398 = vsub.s32 %v395, %v397
        %v399 = vrot.slane %v391, %v398
        %v401 = vunpack.c.l.s4 1983009808
        %v402 = vunpack.c.0.s8 %v401
        %v403 = vlaneseq
        %v404 = vshrl.u32 %v403, 7
        %v405 = vsub.s32 %v402, %v404
        %v406 = vrot.slane %v392, %v405
        %v407 = vcombine.low %v383, %v399
        %v408 = vcombine.high %v383, %v399
        %v410 = vunpack.c.l.s4 1934713408
        %v411 = vunpack.c.0.s8 %v410
        %v412 = vlaneseq
        %v413 = vshrl.u32 %v412, 7
        %v414 = vsub.s32 %v411, %v413
        %v415 = vrot.slane %v407, %v414
        %v417 = vunpack.c.l.s4 1934713408
        %v418 = vunpack.c.0.s8 %v417
        %v419 = vlaneseq
        %v420 = vshrl.u32 %v419, 7
        %v421 = vsub.s32 %v418, %v420
        %v422 = vrot.slane %v408, %v421
        %v423 = vcombine.low %v390, %v406
        %v424 = vcombine.high %v390, %v406
        %v426 = vunpack.c.l.s4 1934713408
        %v427 = vunpack.c.0.s8 %v426
        %v428 = vlaneseq
        %v429 = vshrl.u32 %v428, 7
        %v430 = vsub.s32 %v427, %v429
        %v431 = vrot.slane %v423, %v430
        %v433 = vunpack.c.l.s4 1934713408
        %v434 = vunpack.c.0.s8 %v433
        %v435 = vlaneseq
        %v436 = vshrl.u32 %v435, 7
        %v437 = vsub.s32 %v434, %v436
        %v438 = vrot.slane %v424, %v437
        %v439 = vcombine.high %v415, 0.0
        %v440 = vcombine.high %v422, 0.0
        %v441 = vcombine.high %v431, 0.0
        %v442 = vcombine.high %v438, 0.0
        %v443 = vcombine.low %v415, %v422
        %v445 = vunpack.c.l.s4 1983009808
        %v446 = vunpack.c.0.s8 %v445
        %v447 = vlaneseq
        %v448 = vshrl.u32 %v447, 7
        %v449 = vsub.s32 %v446, %v448
        %v450 = vrot.slane %v443, %v449
        %v451 = vcombine.low %v439, %v440
        %v453 = vunpack.c.l.s4 1983009808
        %v454 = vunpack.c.0.s8 %v453
        %v455 = vlaneseq
        %v456 = vshrl.u32 %v455, 7
        %v457 = vsub.s32 %v454, %v456
        %v458 = vrot.slane %v451, %v457
        %v459 = vcombine.low %v431, %v438
        %v461 = vunpack.c.l.s4 1983009808
        %v462 = vunpack.c.0.s8 %v461
        %v463 = vlaneseq
        %v464 = vshrl.u32 %v463, 7
        %v465 = vsub.s32 %v462, %v464
        %v466 = vrot.slane %v459, %v465
        %v467 = vcombine.low %v441, %v442
        %v469 = vunpack.c.l.s4 1983009808
        %v470 = vunpack.c.0.s8 %v469
        %v471 = vlaneseq
        %v472 = vshrl.u32 %v471, 7
        %v473 = vsub.s32 %v470, %v472
        %v474 = vrot.slane %v467, %v473
        %v475 = vcombine.low %v450, %v458
        %v476 = vcombine.high %v450, %v458
        %v478 = vunpack.c.l.s4 1934713408
        %v479 = vunpack.c.0.s8 %v478
        %v480 = vlaneseq
        %v481 = vshrl.u32 %v480, 7
        %v482 = vsub.s32 %v479, %v481
        %v483 = vrot.slane %v475, %v482
        %v485 = vunpack.c.l.s4 1934713408
        %v486 = vunpack.c.0.s8 %v485
        %v487 = vlaneseq
        %v488 = vshrl.u32 %v487, 7
        %v489 = vsub.s32 %v486, %v488
        %v490 = vrot.slane %v476, %v489
        %v491 = vcombine.low %v466, %v474
        %v492 = vcombine.high %v466, %v474
        %v494 = vunpack.c.l.s4 1934713408
        %v495 = vunpack.c.0.s8 %v494
        %v496 = vlaneseq
        %v497 = vshrl.u32 %v496, 7
        %v498 = vsub.s32 %v495, %v497
        %v499 = vrot.slane %v491, %v498
        %v501 = vunpack.c.l.s4 1934713408
        %v502 = vunpack.c.0.s8 %v501
        %v503 = vlaneseq
        %v504 = vshrl.u32 %v503, 7
        %v505 = vsub.s32 %v502, %v504
        %v506 = vrot.slane %v492, %v505
        %v507 = vcombine.low %v483, %v499
        %v508 = vcombine.high %v483, %v499
        %v509 = vcombine.low %v490, %v506
        %v510 = vcombine.high %v490, %v506
        %v511 = vpack.c.bf16 %v507, %v507
        %v512 = vpack.c.bf16 %v508, %v508
        %v513 = vpack.c.bf16 %v509, %v509
        %v514 = vpack.c.bf16 %v510, %v510
        %vm515 = vcmask 60416
        %516 = vst.msk [vmem:[%s279] sm:$0xf] %vm515, %v511
        %517 = vst.msk [vmem:[%s279 + $0x4] sm:$0xf] %vm515, %v512
        %518 = vst.msk [vmem:[%s279 + $0x8] sm:$0xf] %vm515, %v513
        %519 = vst.msk [vmem:[%s279 + $0xc] sm:$0xf] %vm515, %v514
        %521 = vrot.lane.b32.xlu0 %v359, 120
        %v522 = vpop.permute.xlu0 %521
        %523 = vrot.lane.b32.xlu0 %v359, 112
        %v524 = vpop.permute.xlu0 %523
        %525 = vrot.lane.b32.xlu0 %v359, 104
        %v526 = vpop.permute.xlu0 %525
        %527 = vrot.lane.b32.xlu0 %v359, 96
        %v528 = vpop.permute.xlu0 %527
        %529 = vrot.lane.b32.xlu0 %v522, 96
        %v530 = vpop.permute.xlu0 %529
        %531 = vrot.lane.b32.xlu0 %v524, 96
        %v532 = vpop.permute.xlu0 %531
        %533 = vrot.lane.b32.xlu0 %v526, 96
        %v534 = vpop.permute.xlu0 %533
        %v539 = vcombine.low %v528, %v532
        %v540 = vcombine.high %v528, %v532
        %v542 = vunpack.c.l.s4 1983009808
        %v543 = vunpack.c.0.s8 %v542
        %v544 = vlaneseq
        %v545 = vshrl.u32 %v544, 7
        %v546 = vsub.s32 %v543, %v545
        %v547 = vrot.slane %v539, %v546
        %v549 = vunpack.c.l.s4 1983009808
        %v550 = vunpack.c.0.s8 %v549
        %v551 = vlaneseq
        %v552 = vshrl.u32 %v551, 7
        %v553 = vsub.s32 %v550, %v552
        %v554 = vrot.slane %v540, %v553
        %v555 = vcombine.low %v530, %v534
        %v556 = vcombine.high %v530, %v534
        %v558 = vunpack.c.l.s4 1983009808
        %v559 = vunpack.c.0.s8 %v558
        %v560 = vlaneseq
        %v561 = vshrl.u32 %v560, 7
        %v562 = vsub.s32 %v559, %v561
        %v563 = vrot.slane %v555, %v562
        %v565 = vunpack.c.l.s4 1983009808
        %v566 = vunpack.c.0.s8 %v565
        %v567 = vlaneseq
        %v568 = vshrl.u32 %v567, 7
        %v569 = vsub.s32 %v566, %v568
        %v570 = vrot.slane %v556, %v569
        %v571 = vcombine.low %v547, %v563
        %v572 = vcombine.high %v547, %v563
        %v574 = vunpack.c.l.s4 1934713408
        %v575 = vunpack.c.0.s8 %v574
        %v576 = vlaneseq
        %v577 = vshrl.u32 %v576, 7
        %v578 = vsub.s32 %v575, %v577
        %v579 = vrot.slane %v571, %v578
        %v581 = vunpack.c.l.s4 1934713408
        %v582 = vunpack.c.0.s8 %v581
        %v583 = vlaneseq
        %v584 = vshrl.u32 %v583, 7
        %v585 = vsub.s32 %v582, %v584
        %v586 = vrot.slane %v572, %v585
        %v587 = vcombine.low %v554, %v570
        %v588 = vcombine.high %v554, %v570
        %v590 = vunpack.c.l.s4 1934713408
        %v591 = vunpack.c.0.s8 %v590
        %v592 = vlaneseq
        %v593 = vshrl.u32 %v592, 7
        %v594 = vsub.s32 %v591, %v593
        %v595 = vrot.slane %v587, %v594
        %v597 = vunpack.c.l.s4 1934713408
        %v598 = vunpack.c.0.s8 %v597
        %v599 = vlaneseq
        %v600 = vshrl.u32 %v599, 7
        %v601 = vsub.s32 %v598, %v600
        %v602 = vrot.slane %v588, %v601
        %v603 = vcombine.high %v579, 0.0
        %v604 = vcombine.high %v586, 0.0
        %v605 = vcombine.high %v595, 0.0
        %v606 = vcombine.high %v602, 0.0
        %607 = vxpose.xlu0.b32.start [1/16] %v579, 128
        %608 = vxpose.xlu0.b32.cont [2/16] 0.0, 128
        %609 = vxpose.xlu0.b32.cont [3/16] 0.0, 128
        %610 = vxpose.xlu0.b32.cont [4/16] 0.0, 128
        %611 = vxpose.xlu0.b32.cont [5/16] 0.0, 128
        %612 = vxpose.xlu0.b32.cont [6/16] 0.0, 128
        %613 = vxpose.xlu0.b32.cont [7/16] 0.0, 128
        %614 = vxpose.xlu0.b32.cont [8/16] 0.0, 128
        %615 = vxpose.xlu0.b32.cont [9/16] 0.0, 128
        %616 = vxpose.xlu0.b32.cont [10/16] 0.0, 128
        %617 = vxpose.xlu0.b32.cont [11/16] 0.0, 128
        %618 = vxpose.xlu0.b32.cont [12/16] 0.0, 128
        %619 = vxpose.xlu0.b32.cont [13/16] 0.0, 128
        %620 = vxpose.xlu0.b32.cont [14/16] 0.0, 128
        %621 = vxpose.xlu0.b32.cont [15/16] 0.0, 128
        %622 = vxpose.xlu0.b32.end [16/16] 0.0, 128
        %v623 = vpop.trf.xlu0
        %v624 = vpop.trf.xlu0
        %v625 = vpop.trf.xlu0
        %v626 = vpop.trf.xlu0
        %v627 = vpop.trf.xlu0
        %v628 = vpop.trf.xlu0
        %v629 = vpop.trf.xlu0
        %v630 = vpop.trf.xlu0
        %v631 = vpop.trf.xlu0
        %v632 = vpop.trf.xlu0
        %v633 = vpop.trf.xlu0
        %v634 = vpop.trf.xlu0
        %v635 = vpop.trf.xlu0
        %v636 = vpop.trf.xlu0
        %v637 = vpop.trf.xlu0
        %v638 = vpop.trf.xlu0
        %639 = vxpose.xlu0.b32.start [1/16] %v603, 128
        %640 = vxpose.xlu0.b32.cont [2/16] 0.0, 128
        %641 = vxpose.xlu0.b32.cont [3/16] 0.0, 128
        %642 = vxpose.xlu0.b32.cont [4/16] 0.0, 128
        %643 = vxpose.xlu0.b32.cont [5/16] 0.0, 128
        %644 = vxpose.xlu0.b32.cont [6/16] 0.0, 128
        %645 = vxpose.xlu0.b32.cont [7/16] 0.0, 128
        %646 = vxpose.xlu0.b32.cont [8/16] 0.0, 128
        %647 = vxpose.xlu0.b32.cont [9/16] 0.0, 128
        %648 = vxpose.xlu0.b32.cont [10/16] 0.0, 128
        %649 = vxpose.xlu0.b32.cont [11/16] 0.0, 128
        %650 = vxpose.xlu0.b32.cont [12/16] 0.0, 128
        %651 = vxpose.xlu0.b32.cont [13/16] 0.0, 128
        %652 = vxpose.xlu0.b32.cont [14/16] 0.0, 128
        %653 = vxpose.xlu0.b32.cont [15/16] 0.0, 128
        %654 = vxpose.xlu0.b32.end [16/16] 0.0, 128
        %v655 = vpop.trf.xlu0
        %v656 = vpop.trf.xlu0
        %v657 = vpop.trf.xlu0
        %v658 = vpop.trf.xlu0
        %v659 = vpop.trf.xlu0
        %v660 = vpop.trf.xlu0
        %v661 = vpop.trf.xlu0
        %v662 = vpop.trf.xlu0
        %v663 = vpop.trf.xlu0
        %v664 = vpop.trf.xlu0
        %v665 = vpop.trf.xlu0
        %v666 = vpop.trf.xlu0
        %v667 = vpop.trf.xlu0
        %v668 = vpop.trf.xlu0
        %v669 = vpop.trf.xlu0
        %v670 = vpop.trf.xlu0
        %671 = vxpose.xlu0.b32.start [1/16] %v586, 128
        %672 = vxpose.xlu0.b32.cont [2/16] 0.0, 128
        %673 = vxpose.xlu0.b32.cont [3/16] 0.0, 128
        %674 = vxpose.xlu0.b32.cont [4/16] 0.0, 128
        %675 = vxpose.xlu0.b32.cont [5/16] 0.0, 128
        %676 = vxpose.xlu0.b32.cont [6/16] 0.0, 128
        %677 = vxpose.xlu0.b32.cont [7/16] 0.0, 128
        %678 = vxpose.xlu0.b32.cont [8/16] 0.0, 128
        %679 = vxpose.xlu0.b32.cont [9/16] 0.0, 128
        %680 = vxpose.xlu0.b32.cont [10/16] 0.0, 128
        %681 = vxpose.xlu0.b32.cont [11/16] 0.0, 128
        %682 = vxpose.xlu0.b32.cont [12/16] 0.0, 128
        %683 = vxpose.xlu0.b32.cont [13/16] 0.0, 128
        %684 = vxpose.xlu0.b32.cont [14/16] 0.0, 128
        %685 = vxpose.xlu0.b32.cont [15/16] 0.0, 128
        %686 = vxpose.xlu0.b32.end [16/16] 0.0, 128
        %v687 = vpop.trf.xlu0
        %v688 = vpop.trf.xlu0
        %v689 = vpop.trf.xlu0
        %v690 = vpop.trf.xlu0
        %v691 = vpop.trf.xlu0
        %v692 = vpop.trf.xlu0
        %v693 = vpop.trf.xlu0
        %v694 = vpop.trf.xlu0
        %v695 = vpop.trf.xlu0
        %v696 = vpop.trf.xlu0
        %v697 = vpop.trf.xlu0
        %v698 = vpop.trf.xlu0
        %v699 = vpop.trf.xlu0
        %v700 = vpop.trf.xlu0
        %v701 = vpop.trf.xlu0
        %v702 = vpop.trf.xlu0
        %703 = vxpose.xlu0.b32.start [1/16] %v604, 128
        %704 = vxpose.xlu0.b32.cont [2/16] 0.0, 128
        %705 = vxpose.xlu0.b32.cont [3/16] 0.0, 128
        %706 = vxpose.xlu0.b32.cont [4/16] 0.0, 128
        %707 = vxpose.xlu0.b32.cont [5/16] 0.0, 128
        %708 = vxpose.xlu0.b32.cont [6/16] 0.0, 128
        %709 = vxpose.xlu0.b32.cont [7/16] 0.0, 128
        %710 = vxpose.xlu0.b32.cont [8/16] 0.0, 128
        %711 = vxpose.xlu0.b32.cont [9/16] 0.0, 128
        %712 = vxpose.xlu0.b32.cont [10/16] 0.0, 128
        %713 = vxpose.xlu0.b32.cont [11/16] 0.0, 128
        %714 = vxpose.xlu0.b32.cont [12/16] 0.0, 128
        %715 = vxpose.xlu0.b32.cont [13/16] 0.0, 128
        %716 = vxpose.xlu0.b32.cont [14/16] 0.0, 128
        %717 = vxpose.xlu0.b32.cont [15/16] 0.0, 128
        %718 = vxpose.xlu0.b32.end [16/16] 0.0, 128
        %v719 = vpop.trf.xlu0
        %v720 = vpop.trf.xlu0
        %v721 = vpop.trf.xlu0
        %v722 = vpop.trf.xlu0
        %v723 = vpop.trf.xlu0
        %v724 = vpop.trf.xlu0
        %v725 = vpop.trf.xlu0
        %v726 = vpop.trf.xlu0
        %v727 = vpop.trf.xlu0
        %v728 = vpop.trf.xlu0
        %v729 = vpop.trf.xlu0
        %v730 = vpop.trf.xlu0
        %v731 = vpop.trf.xlu0
        %v732 = vpop.trf.xlu0
        %v733 = vpop.trf.xlu0
        %v734 = vpop.trf.xlu0
        %735 = vxpose.xlu0.b32.start [1/16] %v595, 128
        %736 = vxpose.xlu0.b32.cont [2/16] 0.0, 128
        %737 = vxpose.xlu0.b32.cont [3/16] 0.0, 128
        %738 = vxpose.xlu0.b32.cont [4/16] 0.0, 128
        %739 = vxpose.xlu0.b32.cont [5/16] 0.0, 128
        %740 = vxpose.xlu0.b32.cont [6/16] 0.0, 128
        %741 = vxpose.xlu0.b32.cont [7/16] 0.0, 128
        %742 = vxpose.xlu0.b32.cont [8/16] 0.0, 128
        %743 = vxpose.xlu0.b32.cont [9/16] 0.0, 128
        %744 = vxpose.xlu0.b32.cont [10/16] 0.0, 128
        %745 = vxpose.xlu0.b32.cont [11/16] 0.0, 128
        %746 = vxpose.xlu0.b32.cont [12/16] 0.0, 128
        %747 = vxpose.xlu0.b32.cont [13/16] 0.0, 128
        %748 = vxpose.xlu0.b32.cont [14/16] 0.0, 128
        %749 = vxpose.xlu0.b32.cont [15/16] 0.0, 128
        %750 = vxpose.xlu0.b32.end [16/16] 0.0, 128
        %v751 = vpop.trf.xlu0
        %v752 = vpop.trf.xlu0
        %v753 = vpop.trf.xlu0
        %v754 = vpop.trf.xlu0
        %v755 = vpop.trf.xlu0
        %v756 = vpop.trf.xlu0
        %v757 = vpop.trf.xlu0
        %v758 = vpop.trf.xlu0
        %v759 = vpop.trf.xlu0
        %v760 = vpop.trf.xlu0
        %v761 = vpop.trf.xlu0
        %v762 = vpop.trf.xlu0
        %v763 = vpop.trf.xlu0
        %v764 = vpop.trf.xlu0
        %v765 = vpop.trf.xlu0
        %v766 = vpop.trf.xlu0
        %767 = vxpose.xlu0.b32.start [1/16] %v605, 128
        %768 = vxpose.xlu0.b32.cont [2/16] 0.0, 128
        %769 = vxpose.xlu0.b32.cont [3/16] 0.0, 128
        %770 = vxpose.xlu0.b32.cont [4/16] 0.0, 128
        %771 = vxpose.xlu0.b32.cont [5/16] 0.0, 128
        %772 = vxpose.xlu0.b32.cont [6/16] 0.0, 128
        %773 = vxpose.xlu0.b32.cont [7/16] 0.0, 128
        %774 = vxpose.xlu0.b32.cont [8/16] 0.0, 128
        %775 = vxpose.xlu0.b32.cont [9/16] 0.0, 128
        %776 = vxpose.xlu0.b32.cont [10/16] 0.0, 128
        %777 = vxpose.xlu0.b32.cont [11/16] 0.0, 128
        %778 = vxpose.xlu0.b32.cont [12/16] 0.0, 128
        %779 = vxpose.xlu0.b32.cont [13/16] 0.0, 128
        %780 = vxpose.xlu0.b32.cont [14/16] 0.0, 128
        %781 = vxpose.xlu0.b32.cont [15/16] 0.0, 128
        %782 = vxpose.xlu0.b32.end [16/16] 0.0, 128
        %v783 = vpop.trf.xlu0
        %v784 = vpop.trf.xlu0
        %v785 = vpop.trf.xlu0
        %v786 = vpop.trf.xlu0
        %v787 = vpop.trf.xlu0
        %v788 = vpop.trf.xlu0
        %v789 = vpop.trf.xlu0
        %v790 = vpop.trf.xlu0
        %v791 = vpop.trf.xlu0
        %v792 = vpop.trf.xlu0
        %v793 = vpop.trf.xlu0
        %v794 = vpop.trf.xlu0
        %v795 = vpop.trf.xlu0
        %v796 = vpop.trf.xlu0
        %v797 = vpop.trf.xlu0
        %v798 = vpop.trf.xlu0
        %799 = vxpose.xlu0.b32.start [1/16] %v602, 128
        %800 = vxpose.xlu0.b32.cont [2/16] 0.0, 128
        %801 = vxpose.xlu0.b32.cont [3/16] 0.0, 128
        %802 = vxpose.xlu0.b32.cont [4/16] 0.0, 128
        %803 = vxpose.xlu0.b32.cont [5/16] 0.0, 128
        %804 = vxpose.xlu0.b32.cont [6/16] 0.0, 128
        %805 = vxpose.xlu0.b32.cont [7/16] 0.0, 128
        %806 = vxpose.xlu0.b32.cont [8/16] 0.0, 128
        %807 = vxpose.xlu0.b32.cont [9/16] 0.0, 128
        %808 = vxpose.xlu0.b32.cont [10/16] 0.0, 128
        %809 = vxpose.xlu0.b32.cont [11/16] 0.0, 128
        %810 = vxpose.xlu0.b32.cont [12/16] 0.0, 128
        %811 = vxpose.xlu0.b32.cont [13/16] 0.0, 128
        %812 = vxpose.xlu0.b32.cont [14/16] 0.0, 128
        %813 = vxpose.xlu0.b32.cont [15/16] 0.0, 128
        %814 = vxpose.xlu0.b32.end [16/16] 0.0, 128
        %v815 = vpop.trf.xlu0
        %v816 = vpop.trf.xlu0
        %v817 = vpop.trf.xlu0
        %v818 = vpop.trf.xlu0
        %v819 = vpop.trf.xlu0
        %v820 = vpop.trf.xlu0
        %v821 = vpop.trf.xlu0
        %v822 = vpop.trf.xlu0
        %v823 = vpop.trf.xlu0
        %v824 = vpop.trf.xlu0
        %v825 = vpop.trf.xlu0
        %v826 = vpop.trf.xlu0
        %v827 = vpop.trf.xlu0
        %v828 = vpop.trf.xlu0
        %v829 = vpop.trf.xlu0
        %v830 = vpop.trf.xlu0
        %831 = vxpose.xlu0.b32.start [1/16] %v606, 128
        %832 = vxpose.xlu0.b32.cont [2/16] 0.0, 128
        %833 = vxpose.xlu0.b32.cont [3/16] 0.0, 128
        %834 = vxpose.xlu0.b32.cont [4/16] 0.0, 128
        %835 = vxpose.xlu0.b32.cont [5/16] 0.0, 128
        %836 = vxpose.xlu0.b32.cont [6/16] 0.0, 128
        %837 = vxpose.xlu0.b32.cont [7/16] 0.0, 128
        %838 = vxpose.xlu0.b32.cont [8/16] 0.0, 128
        %839 = vxpose.xlu0.b32.cont [9/16] 0.0, 128
        %840 = vxpose.xlu0.b32.cont [10/16] 0.0, 128
        %841 = vxpose.xlu0.b32.cont [11/16] 0.0, 128
        %842 = vxpose.xlu0.b32.cont [12/16] 0.0, 128
        %843 = vxpose.xlu0.b32.cont [13/16] 0.0, 128
        %844 = vxpose.xlu0.b32.cont [14/16] 0.0, 128
        %845 = vxpose.xlu0.b32.cont [15/16] 0.0, 128
        %846 = vxpose.xlu0.b32.end [16/16] 0.0, 128
        %v847 = vpop.trf.xlu0
        %v848 = vpop.trf.xlu0
        %v849 = vpop.trf.xlu0
        %v850 = vpop.trf.xlu0
        %v851 = vpop.trf.xlu0
        %v852 = vpop.trf.xlu0
        %v853 = vpop.trf.xlu0
        %v854 = vpop.trf.xlu0
        %v855 = vpop.trf.xlu0
        %v856 = vpop.trf.xlu0
        %v857 = vpop.trf.xlu0
        %v858 = vpop.trf.xlu0
        %v859 = vpop.trf.xlu0
        %v860 = vpop.trf.xlu0
        %v861 = vpop.trf.xlu0
        %v862 = vpop.trf.xlu0
        %v863 = vcombine.low %v623, %v687
        %v864 = vcombine.high %v623, %v687
        %v866 = vunpack.c.l.s4 1983009808
        %v867 = vunpack.c.0.s8 %v866
        %v868 = vlaneseq
        %v869 = vshrl.u32 %v868, 7
        %v870 = vsub.s32 %v867, %v869
        %v871 = vrot.slane %v863, %v870
        %v873 = vunpack.c.l.s4 1983009808
        %v874 = vunpack.c.0.s8 %v873
        %v875 = vlaneseq
        %v876 = vshrl.u32 %v875, 7
        %v877 = vsub.s32 %v874, %v876
        %v878 = vrot.slane %v864, %v877
        %v879 = vcombine.low %v655, %v719
        %v880 = vcombine.high %v655, %v719
        %v882 = vunpack.c.l.s4 1983009808
        %v883 = vunpack.c.0.s8 %v882
        %v884 = vlaneseq
        %v885 = vshrl.u32 %v884, 7
        %v886 = vsub.s32 %v883, %v885
        %v887 = vrot.slane %v879, %v886
        %v889 = vunpack.c.l.s4 1983009808
        %v890 = vunpack.c.0.s8 %v889
        %v891 = vlaneseq
        %v892 = vshrl.u32 %v891, 7
        %v893 = vsub.s32 %v890, %v892
        %v894 = vrot.slane %v880, %v893
        %v895 = vcombine.low %v751, %v815
        %v896 = vcombine.high %v751, %v815
        %v898 = vunpack.c.l.s4 1983009808
        %v899 = vunpack.c.0.s8 %v898
        %v900 = vlaneseq
        %v901 = vshrl.u32 %v900, 7
        %v902 = vsub.s32 %v899, %v901
        %v903 = vrot.slane %v895, %v902
        %v905 = vunpack.c.l.s4 1983009808
        %v906 = vunpack.c.0.s8 %v905
        %v907 = vlaneseq
        %v908 = vshrl.u32 %v907, 7
        %v909 = vsub.s32 %v906, %v908
        %v910 = vrot.slane %v896, %v909
        %v911 = vcombine.low %v783, %v847
        %v912 = vcombine.high %v783, %v847
        %v914 = vunpack.c.l.s4 1983009808
        %v915 = vunpack.c.0.s8 %v914
        %v916 = vlaneseq
        %v917 = vshrl.u32 %v916, 7
        %v918 = vsub.s32 %v915, %v917
        %v919 = vrot.slane %v911, %v918
        %v921 = vunpack.c.l.s4 1983009808
        %v922 = vunpack.c.0.s8 %v921
        %v923 = vlaneseq
        %v924 = vshrl.u32 %v923, 7
        %v925 = vsub.s32 %v922, %v924
        %v926 = vrot.slane %v912, %v925
        %v927 = vcombine.low %v871, %v887
        %v928 = vcombine.high %v871, %v887
        %v930 = vunpack.c.l.s4 1934713408
        %v931 = vunpack.c.0.s8 %v930
        %v932 = vlaneseq
        %v933 = vshrl.u32 %v932, 7
        %v934 = vsub.s32 %v931, %v933
        %v935 = vrot.slane %v927, %v934
        %v937 = vunpack.c.l.s4 1934713408
        %v938 = vunpack.c.0.s8 %v937
        %v939 = vlaneseq
        %v940 = vshrl.u32 %v939, 7
        %v941 = vsub.s32 %v938, %v940
        %v942 = vrot.slane %v928, %v941
        %v943 = vcombine.low %v878, %v894
        %v944 = vcombine.high %v878, %v894
        %v946 = vunpack.c.l.s4 1934713408
        %v947 = vunpack.c.0.s8 %v946
        %v948 = vlaneseq
        %v949 = vshrl.u32 %v948, 7
        %v950 = vsub.s32 %v947, %v949
        %v951 = vrot.slane %v943, %v950
        %v953 = vunpack.c.l.s4 1934713408
        %v954 = vunpack.c.0.s8 %v953
        %v955 = vlaneseq
        %v956 = vshrl.u32 %v955, 7
        %v957 = vsub.s32 %v954, %v956
        %v958 = vrot.slane %v944, %v957
        %v959 = vcombine.low %v903, %v919
        %v960 = vcombine.high %v903, %v919
        %v962 = vunpack.c.l.s4 1934713408
        %v963 = vunpack.c.0.s8 %v962
        %v964 = vlaneseq
        %v965 = vshrl.u32 %v964, 7
        %v966 = vsub.s32 %v963, %v965
        %v967 = vrot.slane %v959, %v966
        %v969 = vunpack.c.l.s4 1934713408
        %v970 = vunpack.c.0.s8 %v969
        %v971 = vlaneseq
        %v972 = vshrl.u32 %v971, 7
        %v973 = vsub.s32 %v970, %v972
        %v974 = vrot.slane %v960, %v973
        %v975 = vcombine.low %v910, %v926
        %v976 = vcombine.high %v910, %v926
        %v978 = vunpack.c.l.s4 1934713408
        %v979 = vunpack.c.0.s8 %v978
        %v980 = vlaneseq
        %v981 = vshrl.u32 %v980, 7
        %v982 = vsub.s32 %v979, %v981
        %v983 = vrot.slane %v975, %v982
        %v985 = vunpack.c.l.s4 1934713408
        %v986 = vunpack.c.0.s8 %v985
        %v987 = vlaneseq
        %v988 = vshrl.u32 %v987, 7
        %v989 = vsub.s32 %v986, %v988
        %v990 = vrot.slane %v976, %v989
        %v991 = vcombine.low %v935, %v967
        %v992 = vcombine.high %v935, %v967
        %v993 = vcombine.low %v942, %v974
        %v994 = vcombine.high %v942, %v974
        %v995 = vcombine.low %v951, %v983
        %v996 = vcombine.high %v951, %v983
        %v997 = vcombine.low %v958, %v990
        %v998 = vcombine.high %v958, %v990
        %999 = vxpose.xlu0.b32.start [1/16] %v991, 128
        %1000 = vxpose.xlu0.b32.cont [2/16] 0.0, 128
        %1001 = vxpose.xlu0.b32.cont [3/16] 0.0, 128
        %1002 = vxpose.xlu0.b32.cont [4/16] 0.0, 128
        %1003 = vxpose.xlu0.b32.cont [5/16] 0.0, 128
        %1004 = vxpose.xlu0.b32.cont [6/16] 0.0, 128
        %1005 = vxpose.xlu0.b32.cont [7/16] 0.0, 128
        %1006 = vxpose.xlu0.b32.cont [8/16] 0.0, 128
        %1007 = vxpose.xlu0.b32.cont [9/16] 0.0, 128
        %1008 = vxpose.xlu0.b32.cont [10/16] 0.0, 128
        %1009 = vxpose.xlu0.b32.cont [11/16] 0.0, 128
        %1010 = vxpose.xlu0.b32.cont [12/16] 0.0, 128
        %1011 = vxpose.xlu0.b32.cont [13/16] 0.0, 128
        %1012 = vxpose.xlu0.b32.cont [14/16] 0.0, 128
        %1013 = vxpose.xlu0.b32.cont [15/16] 0.0, 128
        %1014 = vxpose.xlu0.b32.end [16/16] 0.0, 128
        %v1015 = vpop.trf.xlu0
        %v1016 = vpop.trf.xlu0
        %v1017 = vpop.trf.xlu0
        %v1018 = vpop.trf.xlu0
        %v1019 = vpop.trf.xlu0
        %v1020 = vpop.trf.xlu0
        %v1021 = vpop.trf.xlu0
        %v1022 = vpop.trf.xlu0
        %v1023 = vpop.trf.xlu0
        %v1024 = vpop.trf.xlu0
        %v1025 = vpop.trf.xlu0
        %v1026 = vpop.trf.xlu0
        %v1027 = vpop.trf.xlu0
        %v1028 = vpop.trf.xlu0
        %v1029 = vpop.trf.xlu0
        %v1030 = vpop.trf.xlu0
        %1031 = vxpose.xlu0.b32.start [1/16] %v992, 128
        %1032 = vxpose.xlu0.b32.cont [2/16] 0.0, 128
        %1033 = vxpose.xlu0.b32.cont [3/16] 0.0, 128
        %1034 = vxpose.xlu0.b32.cont [4/16] 0.0, 128
        %1035 = vxpose.xlu0.b32.cont [5/16] 0.0, 128
        %1036 = vxpose.xlu0.b32.cont [6/16] 0.0, 128
        %1037 = vxpose.xlu0.b32.cont [7/16] 0.0, 128
        %1038 = vxpose.xlu0.b32.cont [8/16] 0.0, 128
        %1039 = vxpose.xlu0.b32.cont [9/16] 0.0, 128
        %1040 = vxpose.xlu0.b32.cont [10/16] 0.0, 128
        %1041 = vxpose.xlu0.b32.cont [11/16] 0.0, 128
        %1042 = vxpose.xlu0.b32.cont [12/16] 0.0, 128
        %1043 = vxpose.xlu0.b32.cont [13/16] 0.0, 128
        %1044 = vxpose.xlu0.b32.cont [14/16] 0.0, 128
        %1045 = vxpose.xlu0.b32.cont [15/16] 0.0, 128
        %1046 = vxpose.xlu0.b32.end [16/16] 0.0, 128
        %v1047 = vpop.trf.xlu0
        %v1048 = vpop.trf.xlu0
        %v1049 = vpop.trf.xlu0
        %v1050 = vpop.trf.xlu0
        %v1051 = vpop.trf.xlu0
        %v1052 = vpop.trf.xlu0
        %v1053 = vpop.trf.xlu0
        %v1054 = vpop.trf.xlu0
        %v1055 = vpop.trf.xlu0
        %v1056 = vpop.trf.xlu0
        %v1057 = vpop.trf.xlu0
        %v1058 = vpop.trf.xlu0
        %v1059 = vpop.trf.xlu0
        %v1060 = vpop.trf.xlu0
        %v1061 = vpop.trf.xlu0
        %v1062 = vpop.trf.xlu0
        %1063 = vxpose.xlu0.b32.start [1/16] %v993, 128
        %1064 = vxpose.xlu0.b32.cont [2/16] 0.0, 128
        %1065 = vxpose.xlu0.b32.cont [3/16] 0.0, 128
        %1066 = vxpose.xlu0.b32.cont [4/16] 0.0, 128
        %1067 = vxpose.xlu0.b32.cont [5/16] 0.0, 128
        %1068 = vxpose.xlu0.b32.cont [6/16] 0.0, 128
        %1069 = vxpose.xlu0.b32.cont [7/16] 0.0, 128
        %1070 = vxpose.xlu0.b32.cont [8/16] 0.0, 128
        %1071 = vxpose.xlu0.b32.cont [9/16] 0.0, 128
        %1072 = vxpose.xlu0.b32.cont [10/16] 0.0, 128
        %1073 = vxpose.xlu0.b32.cont [11/16] 0.0, 128
        %1074 = vxpose.xlu0.b32.cont [12/16] 0.0, 128
        %1075 = vxpose.xlu0.b32.cont [13/16] 0.0, 128
        %1076 = vxpose.xlu0.b32.cont [14/16] 0.0, 128
        %1077 = vxpose.xlu0.b32.cont [15/16] 0.0, 128
        %1078 = vxpose.xlu0.b32.end [16/16] 0.0, 128
        %v1079 = vpop.trf.xlu0
        %v1080 = vpop.trf.xlu0
        %v1081 = vpop.trf.xlu0
        %v1082 = vpop.trf.xlu0
        %v1083 = vpop.trf.xlu0
        %v1084 = vpop.trf.xlu0
        %v1085 = vpop.trf.xlu0
        %v1086 = vpop.trf.xlu0
        %v1087 = vpop.trf.xlu0
        %v1088 = vpop.trf.xlu0
        %v1089 = vpop.trf.xlu0
        %v1090 = vpop.trf.xlu0
        %v1091 = vpop.trf.xlu0
        %v1092 = vpop.trf.xlu0
        %v1093 = vpop.trf.xlu0
        %v1094 = vpop.trf.xlu0
        %1095 = vxpose.xlu0.b32.start [1/16] %v994, 128
        %1096 = vxpose.xlu0.b32.cont [2/16] 0.0, 128
        %1097 = vxpose.xlu0.b32.cont [3/16] 0.0, 128
        %1098 = vxpose.xlu0.b32.cont [4/16] 0.0, 128
        %1099 = vxpose.xlu0.b32.cont [5/16] 0.0, 128
        %1100 = vxpose.xlu0.b32.cont [6/16] 0.0, 128
        %1101 = vxpose.xlu0.b32.cont [7/16] 0.0, 128
        %1102 = vxpose.xlu0.b32.cont [8/16] 0.0, 128
        %1103 = vxpose.xlu0.b32.cont [9/16] 0.0, 128
        %1104 = vxpose.xlu0.b32.cont [10/16] 0.0, 128
        %1105 = vxpose.xlu0.b32.cont [11/16] 0.0, 128
        %1106 = vxpose.xlu0.b32.cont [12/16] 0.0, 128
        %1107 = vxpose.xlu0.b32.cont [13/16] 0.0, 128
        %1108 = vxpose.xlu0.b32.cont [14/16] 0.0, 128
        %1109 = vxpose.xlu0.b32.cont [15/16] 0.0, 128
        %1110 = vxpose.xlu0.b32.end [16/16] 0.0, 128
        %v1111 = vpop.trf.xlu0
        %v1112 = vpop.trf.xlu0
        %v1113 = vpop.trf.xlu0
        %v1114 = vpop.trf.xlu0
        %v1115 = vpop.trf.xlu0
        %v1116 = vpop.trf.xlu0
        %v1117 = vpop.trf.xlu0
        %v1118 = vpop.trf.xlu0
        %v1119 = vpop.trf.xlu0
        %v1120 = vpop.trf.xlu0
        %v1121 = vpop.trf.xlu0
        %v1122 = vpop.trf.xlu0
        %v1123 = vpop.trf.xlu0
        %v1124 = vpop.trf.xlu0
        %v1125 = vpop.trf.xlu0
        %v1126 = vpop.trf.xlu0
        %1127 = vxpose.xlu0.b32.start [1/16] %v995, 128
        %1128 = vxpose.xlu0.b32.cont [2/16] 0.0, 128
        %1129 = vxpose.xlu0.b32.cont [3/16] 0.0, 128
        %1130 = vxpose.xlu0.b32.cont [4/16] 0.0, 128
        %1131 = vxpose.xlu0.b32.cont [5/16] 0.0, 128
        %1132 = vxpose.xlu0.b32.cont [6/16] 0.0, 128
        %1133 = vxpose.xlu0.b32.cont [7/16] 0.0, 128
        %1134 = vxpose.xlu0.b32.cont [8/16] 0.0, 128
        %1135 = vxpose.xlu0.b32.cont [9/16] 0.0, 128
        %1136 = vxpose.xlu0.b32.cont [10/16] 0.0, 128
        %1137 = vxpose.xlu0.b32.cont [11/16] 0.0, 128
        %1138 = vxpose.xlu0.b32.cont [12/16] 0.0, 128
        %1139 = vxpose.xlu0.b32.cont [13/16] 0.0, 128
        %1140 = vxpose.xlu0.b32.cont [14/16] 0.0, 128
        %1141 = vxpose.xlu0.b32.cont [15/16] 0.0, 128
        %1142 = vxpose.xlu0.b32.end [16/16] 0.0, 128
        %v1143 = vpop.trf.xlu0
        %v1144 = vpop.trf.xlu0
        %v1145 = vpop.trf.xlu0
        %v1146 = vpop.trf.xlu0
        %v1147 = vpop.trf.xlu0
        %v1148 = vpop.trf.xlu0
        %v1149 = vpop.trf.xlu0
        %v1150 = vpop.trf.xlu0
        %v1151 = vpop.trf.xlu0
        %v1152 = vpop.trf.xlu0
        %v1153 = vpop.trf.xlu0
        %v1154 = vpop.trf.xlu0
        %v1155 = vpop.trf.xlu0
        %v1156 = vpop.trf.xlu0
        %v1157 = vpop.trf.xlu0
        %v1158 = vpop.trf.xlu0
        %1159 = vxpose.xlu0.b32.start [1/16] %v996, 128
        %1160 = vxpose.xlu0.b32.cont [2/16] 0.0, 128
        %1161 = vxpose.xlu0.b32.cont [3/16] 0.0, 128
        %1162 = vxpose.xlu0.b32.cont [4/16] 0.0, 128
        %1163 = vxpose.xlu0.b32.cont [5/16] 0.0, 128
        %1164 = vxpose.xlu0.b32.cont [6/16] 0.0, 128
        %1165 = vxpose.xlu0.b32.cont [7/16] 0.0, 128
        %1166 = vxpose.xlu0.b32.cont [8/16] 0.0, 128
        %1167 = vxpose.xlu0.b32.cont [9/16] 0.0, 128
        %1168 = vxpose.xlu0.b32.cont [10/16] 0.0, 128
        %1169 = vxpose.xlu0.b32.cont [11/16] 0.0, 128
        %1170 = vxpose.xlu0.b32.cont [12/16] 0.0, 128
        %1171 = vxpose.xlu0.b32.cont [13/16] 0.0, 128
        %1172 = vxpose.xlu0.b32.cont [14/16] 0.0, 128
        %1173 = vxpose.xlu0.b32.cont [15/16] 0.0, 128
        %1174 = vxpose.xlu0.b32.end [16/16] 0.0, 128
        %v1175 = vpop.trf.xlu0
        %v1176 = vpop.trf.xlu0
        %v1177 = vpop.trf.xlu0
        %v1178 = vpop.trf.xlu0
        %v1179 = vpop.trf.xlu0
        %v1180 = vpop.trf.xlu0
        %v1181 = vpop.trf.xlu0
        %v1182 = vpop.trf.xlu0
        %v1183 = vpop.trf.xlu0
        %v1184 = vpop.trf.xlu0
        %v1185 = vpop.trf.xlu0
        %v1186 = vpop.trf.xlu0
        %v1187 = vpop.trf.xlu0
        %v1188 = vpop.trf.xlu0
        %v1189 = vpop.trf.xlu0
        %v1190 = vpop.trf.xlu0
        %1191 = vxpose.xlu0.b32.start [1/16] %v997, 128
        %1192 = vxpose.xlu0.b32.cont [2/16] 0.0, 128
        %1193 = vxpose.xlu0.b32.cont [3/16] 0.0, 128
        %1194 = vxpose.xlu0.b32.cont [4/16] 0.0, 128
        %1195 = vxpose.xlu0.b32.cont [5/16] 0.0, 128
        %1196 = vxpose.xlu0.b32.cont [6/16] 0.0, 128
        %1197 = vxpose.xlu0.b32.cont [7/16] 0.0, 128
        %1198 = vxpose.xlu0.b32.cont [8/16] 0.0, 128
        %1199 = vxpose.xlu0.b32.cont [9/16] 0.0, 128
        %1200 = vxpose.xlu0.b32.cont [10/16] 0.0, 128
        %1201 = vxpose.xlu0.b32.cont [11/16] 0.0, 128
        %1202 = vxpose.xlu0.b32.cont [12/16] 0.0, 128
        %1203 = vxpose.xlu0.b32.cont [13/16] 0.0, 128
        %1204 = vxpose.xlu0.b32.cont [14/16] 0.0, 128
        %1205 = vxpose.xlu0.b32.cont [15/16] 0.0, 128
        %1206 = vxpose.xlu0.b32.end [16/16] 0.0, 128
        %v1207 = vpop.trf.xlu0
        %v1208 = vpop.trf.xlu0
        %v1209 = vpop.trf.xlu0
        %v1210 = vpop.trf.xlu0
        %v1211 = vpop.trf.xlu0
        %v1212 = vpop.trf.xlu0
        %v1213 = vpop.trf.xlu0
        %v1214 = vpop.trf.xlu0
        %v1215 = vpop.trf.xlu0
        %v1216 = vpop.trf.xlu0
        %v1217 = vpop.trf.xlu0
        %v1218 = vpop.trf.xlu0
        %v1219 = vpop.trf.xlu0
        %v1220 = vpop.trf.xlu0
        %v1221 = vpop.trf.xlu0
        %v1222 = vpop.trf.xlu0
        %1223 = vxpose.xlu0.b32.start [1/16] %v998, 128
        %1224 = vxpose.xlu0.b32.cont [2/16] 0.0, 128
        %1225 = vxpose.xlu0.b32.cont [3/16] 0.0, 128
        %1226 = vxpose.xlu0.b32.cont [4/16] 0.0, 128
        %1227 = vxpose.xlu0.b32.cont [5/16] 0.0, 128
        %1228 = vxpose.xlu0.b32.cont [6/16] 0.0, 128
        %1229 = vxpose.xlu0.b32.cont [7/16] 0.0, 128
        %1230 = vxpose.xlu0.b32.cont [8/16] 0.0, 128
        %1231 = vxpose.xlu0.b32.cont [9/16] 0.0, 128
        %1232 = vxpose.xlu0.b32.cont [10/16] 0.0, 128
        %1233 = vxpose.xlu0.b32.cont [11/16] 0.0, 128
        %1234 = vxpose.xlu0.b32.cont [12/16] 0.0, 128
        %1235 = vxpose.xlu0.b32.cont [13/16] 0.0, 128
        %1236 = vxpose.xlu0.b32.cont [14/16] 0.0, 128
        %1237 = vxpose.xlu0.b32.cont [15/16] 0.0, 128
        %1238 = vxpose.xlu0.b32.end [16/16] 0.0, 128
        %v1239 = vpop.trf.xlu0
        %v1240 = vpop.trf.xlu0
        %v1241 = vpop.trf.xlu0
        %v1242 = vpop.trf.xlu0
        %v1243 = vpop.trf.xlu0
        %v1244 = vpop.trf.xlu0
        %v1245 = vpop.trf.xlu0
        %v1246 = vpop.trf.xlu0
        %v1247 = vpop.trf.xlu0
        %v1248 = vpop.trf.xlu0
        %v1249 = vpop.trf.xlu0
        %v1250 = vpop.trf.xlu0
        %v1251 = vpop.trf.xlu0
        %v1252 = vpop.trf.xlu0
        %v1253 = vpop.trf.xlu0
        %v1254 = vpop.trf.xlu0
        %v1255 = vcombine.low %v1015, %v1079
        %v1257 = vunpack.c.l.s4 1983009808
        %v1258 = vunpack.c.0.s8 %v1257
        %v1259 = vlaneseq
        %v1260 = vshrl.u32 %v1259, 7
        %v1261 = vsub.s32 %v1258, %v1260
        %v1262 = vrot.slane %v1255, %v1261
        %v1263 = vcombine.low %v1047, %v1111
        %v1265 = vunpack.c.l.s4 1983009808
        %v1266 = vunpack.c.0.s8 %v1265
        %v1267 = vlaneseq
        %v1268 = vshrl.u32 %v1267, 7
        %v1269 = vsub.s32 %v1266, %v1268
        %v1270 = vrot.slane %v1263, %v1269
        %v1271 = vcombine.low %v1143, %v1207
        %v1273 = vunpack.c.l.s4 1983009808
        %v1274 = vunpack.c.0.s8 %v1273
        %v1275 = vlaneseq
        %v1276 = vshrl.u32 %v1275, 7
        %v1277 = vsub.s32 %v1274, %v1276
        %v1278 = vrot.slane %v1271, %v1277
        %v1279 = vcombine.low %v1175, %v1239
        %v1281 = vunpack.c.l.s4 1983009808
        %v1282 = vunpack.c.0.s8 %v1281
        %v1283 = vlaneseq
        %v1284 = vshrl.u32 %v1283, 7
        %v1285 = vsub.s32 %v1282, %v1284
        %v1286 = vrot.slane %v1279, %v1285
        %v1287 = vcombine.low %v1262, %v1270
        %v1288 = vcombine.high %v1262, %v1270
        %v1290 = vunpack.c.l.s4 1934713408
        %v1291 = vunpack.c.0.s8 %v1290
        %v1292 = vlaneseq
        %v1293 = vshrl.u32 %v1292, 7
        %v1294 = vsub.s32 %v1291, %v1293
        %v1295 = vrot.slane %v1287, %v1294
        %v1297 = vunpack.c.l.s4 1934713408
        %v1298 = vunpack.c.0.s8 %v1297
        %v1299 = vlaneseq
        %v1300 = vshrl.u32 %v1299, 7
        %v1301 = vsub.s32 %v1298, %v1300
        %v1302 = vrot.slane %v1288, %v1301
        %v1303 = vcombine.low %v1278, %v1286
        %v1304 = vcombine.high %v1278, %v1286
        %v1306 = vunpack.c.l.s4 1934713408
        %v1307 = vunpack.c.0.s8 %v1306
        %v1308 = vlaneseq
        %v1309 = vshrl.u32 %v1308, 7
        %v1310 = vsub.s32 %v1307, %v1309
        %v1311 = vrot.slane %v1303, %v1310
        %v1313 = vunpack.c.l.s4 1934713408
        %v1314 = vunpack.c.0.s8 %v1313
        %v1315 = vlaneseq
        %v1316 = vshrl.u32 %v1315, 7
        %v1317 = vsub.s32 %v1314, %v1316
        %v1318 = vrot.slane %v1304, %v1317
        %v1319 = vcombine.low %v1295, %v1311
        %v1320 = vcombine.high %v1295, %v1311
        %v1321 = vcombine.low %v1302, %v1318
        %v1322 = vcombine.high %v1302, %v1318
        %v1323 = vpack.c.bf16 %v1319, %v1319
        %v1324 = vpack.c.bf16 %v1320, %v1320
        %v1325 = vpack.c.bf16 %v1321, %v1321
        %v1326 = vpack.c.bf16 %v1322, %v1322
        %1327 = vst.msk [vmem:[%s286] sm:$0xf] %vm515, %v1323
        %1328 = vst.msk [vmem:[%s286 + $0x4] sm:$0xf] %vm515, %v1324
        %1329 = vst.msk [vmem:[%s286 + $0x8] sm:$0xf] %vm515, %v1325
        %1330 = vst.msk [vmem:[%s286 + $0xc] sm:$0xf] %vm515, %v1326
        %1331 = vrot.lane.b32.xlu0 %v359, 64
        %v1332 = vpop.permute.xlu0 %1331
        %1333 = vrot.lane.b32.xlu0 %v522, 64
        %v1334 = vpop.permute.xlu0 %1333
        %1335 = vrot.lane.b32.xlu0 %v524, 64
        %v1336 = vpop.permute.xlu0 %1335
        %1337 = vrot.lane.b32.xlu0 %v526, 64
        %v1338 = vpop.permute.xlu0 %1337
        %v1343 = vcombine.low %v1332, %v1336
        %v1344 = vcombine.high %v1332, %v1336
        %v1346 = vunpack.c.l.s4 1983009808
        %v1347 = vunpack.c.0.s8 %v1346
        %v1348 = vlaneseq
        %v1349 = vshrl.u32 %v1348, 7
        %v1350 = vsub.s32 %v1347, %v1349
        %v1351 = vrot.slane %v1343, %v1350
        %v1353 = vunpack.c.l.s4 1983009808
        %v1354 = vunpack.c.0.s8 %v1353
        %v1355 = vlaneseq
        %v1356 = vshrl.u32 %v1355, 7
        %v1357 = vsub.s32 %v1354, %v1356
        %v1358 = vrot.slane %v1344, %v1357
        %v1359 = vcombine.low %v1334, %v1338
        %v1360 = vcombine.high %v1334, %v1338
        %v1362 = vunpack.c.l.s4 1983009808
        %v1363 = vunpack.c.0.s8 %v1362
        %v1364 = vlaneseq
        %v1365 = vshrl.u32 %v1364, 7
        %v1366 = vsub.s32 %v1363, %v1365
        %v1367 = vrot.slane %v1359, %v1366
        %v1369 = vunpack.c.l.s4 1983009808
        %v1370 = vunpack.c.0.s8 %v1369
        %v1371 = vlaneseq
        %v1372 = vshrl.u32 %v1371, 7
        %v1373 = vsub.s32 %v1370, %v1372
        %v1374 = vrot.slane %v1360, %v1373
        %v1375 = vcombine.low %v1351, %v1367
        %v1376 = vcombine.high %v1351, %v1367
        %v1378 = vunpack.c.l.s4 1934713408
        %v1379 = vunpack.c.0.s8 %v1378
        %v1380 = vlaneseq
        %v1381 = vshrl.u32 %v1380, 7
        %v1382 = vsub.s32 %v1379, %v1381
        %v1383 = vrot.slane %v1375, %v1382
        %v1385 = vunpack.c.l.s4 1934713408
        %v1386 = vunpack.c.0.s8 %v1385
        %v1387 = vlaneseq
        %v1388 = vshrl.u32 %v1387, 7
        %v1389 = vsub.s32 %v1386, %v1388
        %v1390 = vrot.slane %v1376, %v1389
        %v1391 = vcombine.low %v1358, %v1374
        %v1392 = vcombine.high %v1358, %v1374
        %v1394 = vunpack.c.l.s4 1934713408
        %v1395 = vunpack.c.0.s8 %v1394
        %v1396 = vlaneseq
        %v1397 = vshrl.u32 %v1396, 7
        %v1398 = vsub.s32 %v1395, %v1397
        %v1399 = vrot.slane %v1391, %v1398
        %v1401 = vunpack.c.l.s4 1934713408
        %v1402 = vunpack.c.0.s8 %v1401
        %v1403 = vlaneseq
        %v1404 = vshrl.u32 %v1403, 7
        %v1405 = vsub.s32 %v1402, %v1404
        %v1406 = vrot.slane %v1392, %v1405
        %v1407 = vcombine.high %v1383, 0.0
        %v1408 = vcombine.high %v1390, 0.0
        %v1409 = vcombine.high %v1399, 0.0
        %v1410 = vcombine.high %v1406, 0.0
        %v1411 = vcombine.low %v1383, %v1390
        %v1413 = vunpack.c.l.s4 1983009808
        %v1414 = vunpack.c.0.s8 %v1413
        %v1415 = vlaneseq
        %v1416 = vshrl.u32 %v1415, 7
        %v1417 = vsub.s32 %v1414, %v1416
        %v1418 = vrot.slane %v1411, %v1417
        %v1419 = vcombine.low %v1407, %v1408
        %v1421 = vunpack.c.l.s4 1983009808
        %v1422 = vunpack.c.0.s8 %v1421
        %v1423 = vlaneseq
        %v1424 = vshrl.u32 %v1423, 7
        %v1425 = vsub.s32 %v1422, %v1424
        %v1426 = vrot.slane %v1419, %v1425
        %v1427 = vcombine.low %v1399, %v1406
        %v1429 = vunpack.c.l.s4 1983009808
        %v1430 = vunpack.c.0.s8 %v1429
        %v1431 = vlaneseq
        %v1432 = vshrl.u32 %v1431, 7
        %v1433 = vsub.s32 %v1430, %v1432
        %v1434 = vrot.slane %v1427, %v1433
        %v1435 = vcombine.low %v1409, %v1410
        %v1437 = vunpack.c.l.s4 1983009808
        %v1438 = vunpack.c.0.s8 %v1437
        %v1439 = vlaneseq
        %v1440 = vshrl.u32 %v1439, 7
        %v1441 = vsub.s32 %v1438, %v1440
        %v1442 = vrot.slane %v1435, %v1441
        %v1443 = vcombine.low %v1418, %v1426
        %v1444 = vcombine.high %v1418, %v1426
        %v1446 = vunpack.c.l.s4 1934713408
        %v1447 = vunpack.c.0.s8 %v1446
        %v1448 = vlaneseq
        %v1449 = vshrl.u32 %v1448, 7
        %v1450 = vsub.s32 %v1447, %v1449
        %v1451 = vrot.slane %v1443, %v1450
        %v1453 = vunpack.c.l.s4 1934713408
        %v1454 = vunpack.c.0.s8 %v1453
        %v1455 = vlaneseq
        %v1456 = vshrl.u32 %v1455, 7
        %v1457 = vsub.s32 %v1454, %v1456
        %v1458 = vrot.slane %v1444, %v1457
        %v1459 = vcombine.low %v1434, %v1442
        %v1460 = vcombine.high %v1434, %v1442
        %v1462 = vunpack.c.l.s4 1934713408
        %v1463 = vunpack.c.0.s8 %v1462
        %v1464 = vlaneseq
        %v1465 = vshrl.u32 %v1464, 7
        %v1466 = vsub.s32 %v1463, %v1465
        %v1467 = vrot.slane %v1459, %v1466
        %v1469 = vunpack.c.l.s4 1934713408
        %v1470 = vunpack.c.0.s8 %v1469
        %v1471 = vlaneseq
        %v1472 = vshrl.u32 %v1471, 7
        %v1473 = vsub.s32 %v1470, %v1472
        %v1474 = vrot.slane %v1460, %v1473
        %v1475 = vcombine.low %v1451, %v1467
        %v1476 = vcombine.high %v1451, %v1467
        %v1477 = vcombine.low %v1458, %v1474
        %v1478 = vcombine.high %v1458, %v1474
        %v1479 = vpack.c.bf16 %v1475, %v1475
        %v1480 = vpack.c.bf16 %v1476, %v1476
        %v1481 = vpack.c.bf16 %v1477, %v1477
        %v1482 = vpack.c.bf16 %v1478, %v1478
        %1483 = vst.msk [vmem:[%s293] sm:$0xf] %vm515, %v1479
        %1484 = vst.msk [vmem:[%s293 + $0x4] sm:$0xf] %vm515, %v1480
        %1485 = vst.msk [vmem:[%s293 + $0x8] sm:$0xf] %vm515, %v1481
        %1486 = vst.msk [vmem:[%s293 + $0xc] sm:$0xf] %vm515, %v1482
        %s1487 = sand.u32 %s119, 1
        %s1488 = scalar_lea.sflag [#allocation4], %s1487
        %s1489 = sand.u32 %s119, 1
        %s1490 = smul.addr %s1489, 16
        %s1491 = scalar_lea.vmem [#allocation7], %s1490
        %s1492 = sand.u32 %s27, 1
        %s1493 = scalar_lea.sflag [#allocation9], %s1492
        %s1494 = sand.u32 %s147, 1
        %s1495 = smul.addr %s1494, 16
        %s1496 = scalar_lea.vmem [#allocation8], %s1495
        %s1497 = sand.u32 %s27, 1
        %s1498 = scalar_lea.sflag [#allocation9], %s1497
        %s1499 = sand.u32 %s175, 1
        %s1500 = smul.addr %s1499, 16
        %s1501 = scalar_lea.vmem [#allocation10], %s1500
        // Predicated region
        $region41: #{tpu_custom_call.1} parent=31 // pred_check
          %p1502 = pneg %p129
        $region42: #{tpu_custom_call.1} parent=31 // pred_check_branch
          %1504 = sbr.rel (%p1502) target = $region44
        $region43: #{tpu_custom_call.1} parent=31 // pred_region
          %s1506 = ssub.s32 256, 256
          %1507 = vsyncadd %s1488, %s1506
          %s1508 = smul.addr %s31, 4
          %s1509 = sadd.s32 %s32, %s1508
          %s1510 = smul.addr %s1509, 64
          %s1511 = scalar_lea.hbm %s3, %s1510
          %s1512 = sshll.u32 %s1491, 4
          %s1513 = int_to_ptr.vmem [resolvable:$true] %s1512
          %1518 = dma.vmem_to_hbm [thread:$0]  %s1513, 256, %s1511, %s1488, 64, 64, 4
        $region44: #{tpu_custom_call.1} parent=31 // pred_fallthru
          _
        // Predicated region
        $region45: #{tpu_custom_call.1} parent=31 // pred_check
          %p1519 = pneg %p157
        $region46: #{tpu_custom_call.1} parent=31 // pred_check_branch
          %1521 = sbr.rel (%p1519) target = $region48
        $region47: #{tpu_custom_call.1} parent=31 // pred_region
          %s1523 = ssub.s32 256, 256
          %1524 = vsyncadd %s1493, %s1523
          %s1525 = smul.addr %s31, 4
          %s1526 = sadd.s32 %s32, %s1525
          %s1527 = smul.addr %s1526, 64
          %s1528 = scalar_lea.hbm %s4, %s1527
          %s1529 = sshll.u32 %s1496, 4
          %s1530 = int_to_ptr.vmem [resolvable:$true] %s1529
          %1535 = dma.vmem_to_hbm [thread:$0]  %s1530, 256, %s1528, %s1493, 64, 64, 4
        $region48: #{tpu_custom_call.1} parent=31 // pred_fallthru
          _
        // Predicated region
        $region49: #{tpu_custom_call.1} parent=31 // pred_check
          %p1536 = pneg %p185
        $region50: #{tpu_custom_call.1} parent=31 // pred_check_branch
          %1538 = sbr.rel (%p1536) target = $region52
        $region51: #{tpu_custom_call.1} parent=31 // pred_region
          %s1540 = ssub.s32 256, 256
          %1541 = vsyncadd %s1498, %s1540
          %s1542 = smul.addr %s31, 4
          %s1543 = sadd.s32 %s32, %s1542
          %s1544 = smul.addr %s1543, 64
          %s1545 = scalar_lea.hbm %s5, %s1544
          %s1546 = sshll.u32 %s1501, 4
          %s1547 = int_to_ptr.vmem [resolvable:$true] %s1546
          %1552 = dma.vmem_to_hbm [thread:$0]  %s1547, 256, %s1545, %s1498, 64, 64, 4
        $region52: #{tpu_custom_call.1} parent=31 // pred_fallthru
          _
      $region32: #{tpu_custom_call.1} parent=5 // pred_fallthru
        _
      %p1553 = scmp.le.s32.totalorder 2, %s22
      // Predicated region
      $region53: #{tpu_custom_call.1} parent=5 // pred_check
        %p1554 = pneg %p1553
      $region54: #{tpu_custom_call.1} parent=5 // pred_check_branch
        %1556 = sbr.rel (%p1554) target = $region56
      $region55: #{tpu_custom_call.1} parent=5 // pred_region
        %s1557 = ssub.s32 %s22, 2
        // Predicated region
        $region57: #{tpu_custom_call.1} parent=55 // pred_check
          %p1558 = pneg %p135
        $region58: #{tpu_custom_call.1} parent=55 // pred_check_branch
          %1560 = sbr.rel (%p1558) target = $region60
        $region59: #{tpu_custom_call.1} parent=55 // pred_region
          %s1561 = sand.u32 %s120, 1
          %s1562 = scalar_lea.sflag [#allocation4], %s1561
          %s1563 = sand.u32 %s120, 1
          %s1564 = smul.addr %s1563, 16
          %s1565 = scalar_lea.vmem [#allocation7], %s1564
          %1566 = dma.done %s1562, 256
        $region60: #{tpu_custom_call.1} parent=55 // pred_fallthru
          _
        // Predicated region
        $region61: #{tpu_custom_call.1} parent=55 // pred_check
          %p1567 = pneg %p163
        $region62: #{tpu_custom_call.1} parent=55 // pred_check_branch
          %1569 = sbr.rel (%p1567) target = $region64
        $region63: #{tpu_custom_call.1} parent=55 // pred_region
          %s1570 = sand.u32 %s28, 1
          %s1571 = scalar_lea.sflag [#allocation9], %s1570
          %s1572 = sand.u32 %s148, 1
          %s1573 = smul.addr %s1572, 16
          %s1574 = scalar_lea.vmem [#allocation8], %s1573
          %1575 = dma.done %s1571, 256
        $region64: #{tpu_custom_call.1} parent=55 // pred_fallthru
          _
        // Predicated region
        $region65: #{tpu_custom_call.1} parent=55 // pred_check
          %p1576 = pneg %p191
        $region66: #{tpu_custom_call.1} parent=55 // pred_check_branch
          %1578 = sbr.rel (%p1576) target = $region68
        $region67: #{tpu_custom_call.1} parent=55 // pred_region
          %s1579 = sand.u32 %s28, 1
          %s1580 = scalar_lea.sflag [#allocation9], %s1579
          %s1581 = sand.u32 %s176, 1
          %s1582 = smul.addr %s1581, 16
          %s1583 = scalar_lea.vmem [#allocation10], %s1582
          %1584 = dma.done %s1580, 256
        $region68: #{tpu_custom_call.1} parent=55 // pred_fallthru
          _
      $region56: #{tpu_custom_call.1} parent=5 // pred_fallthru
        _
    $region6: #{tpu_custom_call.1} parent=1 // loop_footer
      %s26 = sadd.s32 1, %s22
    $region7: #{tpu_custom_call.1} parent=1 // loop_footer_branch
      %21 = sbr.rel target = $region3
    $region8: #{tpu_custom_call.1} parent=1 // loop_exit
      _
    %1585 = vsyncpa [#allocation3], 1
    %s1586 = scalar_lea.sflag [#allocation3], 1
    %1587 = vsyncpa %s1586, 1
    %1588 = vsyncpa [#allocation6], 1
    %1589 = vsyncpa [#allocation4], 1
    %s1590 = scalar_lea.sflag [#allocation4], 1
    %1591 = vsyncpa %s1590, 1
    %1592 = vsyncpa [#allocation9], 1
    %s1593 = scalar_lea.sflag [#allocation9], 1
    %1594 = vsyncpa %s1593, 1

</llo_original>
